<compile_context>
chip_gen: v5e
topology: v5e:2x2
jax: 0.10.0
libtpu: 0.0.40
codegen_flags: <defaults>
</compile_context>

<pallas_src>
import numpy as np
import jax
import jax.numpy as jnp
from jax.experimental import pallas as pl
from jax.experimental.pallas import tpu as pltpu

LANE = 128      # TPU lane width
SUBLANE = 8     # TPU sublane count


def _round_up(x, m):
    return ((x + m - 1) // m) * m


# ----------------------------------------------------------------------------
# Fused Pallas kernel: num_layers x LSTM  ->  Linear (tiled over vocab)
# ----------------------------------------------------------------------------
def make_decoder_kernel(Tt, Bp, H, num_layers, nvt, unroll_time):
    """Tt: timesteps (T+1), Bp: padded batch, H: hidden dim, nvt: vocab tiles."""
    BF = jnp.bfloat16

    def kernel(*refs):
        x_ref = refs[0]                               # (Tt*Bp, E)   bf16, time-major
        layer_refs = refs[1:1 + 3 * num_layers]       # per layer: W_ih^T, W_hh^T, bias
        lw_ref = refs[1 + 3 * num_layers]             # (H, TILE_V)  bf16  Linear W^T tile
        lb_ref = refs[2 + 3 * num_layers]             # (1, TILE_V)  f32   Linear bias tile
        out_ref = refs[3 + 3 * num_layers]            # (Tt*Bp, TILE_V) f32 logits tile
        xw_scr = refs[4 + 3 * num_layers]             # VMEM (Tt*Bp, Gp) f32: hoisted x@W_ih+b
        hid_scr = refs[5 + 3 * num_layers]            # VMEM (Tt*Bp, H)  f32: hidden states

        def run_lstm():
            for l in range(num_layers):               # static layer loop
                wih_ref = layer_refs[3 * l + 0]       # (in_dim, Gp) bf16
                whh_ref = layer_refs[3 * l + 1]       # (H, Gp)      bf16
                b_ref = layer_refs[3 * l + 2]         # (1, Gp)      f32

                src = x_ref[...] if l == 0 else hid_scr[...].astype(BF)
                # Hoisted input projection + bias for ALL timesteps: one MXU matmul.
                xw_scr[...] = (
                    jnp.dot(src, wih_ref[...], preferred_element_type=jnp.float32)
                    + b_ref[...]
                )

                w_hh = whh_ref[...]                   # loaded once per layer (bf16)

                def step(xw_t, h, c):
                    # Single MXU push per step: (Bp,H)bf16 @ (H,Gp)bf16 -> f32.
                    gates = xw_t + jnp.dot(h.astype(BF), w_hh,
                                           preferred_element_type=jnp.float32)
                    # One sigmoid + one tanh pass over the full gates vreg,
                    # then cheap static lane slices (no per-gate 128-padding).
                    sig = jax.nn.sigmoid(gates)
                    tnh = jnp.tanh(gates)
                    i = sig[:, 0 * H:1 * H]
                    f = sig[:, 1 * H:2 * H]
                    g = tnh[:, 2 * H:3 * H]
                    o = sig[:, 3 * H:4 * H]
                    c_new = f * c + i * g
                    h_new = o * jnp.tanh(c_new)
                    return h_new, c_new

                h = jnp.zeros((Bp, H), jnp.float32)
                c = jnp.zeros((Bp, H), jnp.float32)
                if unroll_time:
                    for t in range(Tt):               # static -> fully unrolled
                        h, c = step(xw_scr[t * Bp:(t + 1) * Bp, :], h, c)
                        hid_scr[t * Bp:(t + 1) * Bp, :] = h
                else:
                    def body(t, carry):
                        h, c = carry
                        row = pl.multiple_of(t * Bp, Bp)
                        h, c = step(xw_scr[pl.ds(row, Bp), :], h, c)
                        hid_scr[pl.ds(row, Bp), :] = h
                        return (h, c)
                    jax.lax.fori_loop(0, Tt, body, (h, c), unroll=2)

        if nvt == 1:
            run_lstm()
        else:
            # Scratch persists across (sequential, "arbitrary") grid steps.
            pl.when(pl.program_id(0) == 0)(run_lstm)

        # Linear over ALL rows for this vocab tile; valid packed rows are
        # gathered in the wrapper with a tiny index take (no one-hot matmul).
        hid = hid_scr[...].astype(BF)
        out_ref[...] = (
            jnp.dot(hid, lw_ref[...], preferred_element_type=jnp.float32)
            + lb_ref[...]
        )

    return kernel


# ----------------------------------------------------------------------------
# Host-side glue
# ----------------------------------------------------------------------------
def packed_order(lengths):
    """(t_idx, b_idx) replicating pack_padded_sequence(batch_first=True).data
    ordering.  `lengths` must be sorted descending (same requirement as torch)."""
    assert list(lengths) == sorted(lengths, reverse=True), \
        "lengths must be sorted in decreasing order"
    t_idx, b_idx = [], []
    max_len = max(lengths)
    for t in range(max_len):
        for b, Lb in enumerate(lengths):
            if Lb > t:
                t_idx.append(t)
                b_idx.append(b)
    return np.asarray(t_idx, np.int32), np.asarray(b_idx, np.int32)


def decoder_forward(params, vis_feat, captions, lengths, num_layers):
    B, T = captions.shape
    E = params["embedding"].shape[1]
    H = params["w_hh_l0"].shape[1]
    V = params["lin_w"].shape[0]
    Tt = T + 1                                   # visual feature prepended
    assert max(lengths) <= Tt

    Gp = _round_up(4 * H, LANE)                  # gate dim padded to lane multiple
    TILE_V = 512 if V >= 512 else LANE           # vocab tile (lane-dense output)
    Vp = _round_up(V, TILE_V)
    NVT = Vp // TILE_V
    Bp = max(SUBLANE, _round_up(B, SUBLANE))     # padded batch (sublane-aligned)

    # --- embedding + concat + transpose (tiny wrapper XLA glue) -------------
    # nn.Dropout: eval-mode identity.
    # TODO(synk): training-mode stochastic dropout mask not reproduced.
    emb = params["embedding"][captions]                              # (B, T, E)
    inp = jnp.concatenate([vis_feat[:, None, :], emb], axis=1)       # (B, Tt, E)
    x = jnp.transpose(inp, (1, 0, 2)).astype(jnp.float32)            # (Tt, B, E)
    x = jnp.pad(x, ((0, 0), (0, Bp - B), (0, 0)))                    # (Tt, Bp, E)
    x = x.reshape(Tt * Bp, E).astype(jnp.bfloat16)                   # bf16 MXU operand

    # --- per-layer LSTM weights (bf16 operands, f32 bias) --------------------
    weight_args, weight_specs = [], []
    for l in range(num_layers):
        in_dim = E if l == 0 else H
        wih = jnp.asarray(params[f"w_ih_l{l}"], jnp.float32).T       # (in_dim, 4H)
        whh = jnp.asarray(params[f"w_hh_l{l}"], jnp.float32).T       # (H, 4H)
        wih = jnp.pad(wih, ((0, 0), (0, Gp - 4 * H))).astype(jnp.bfloat16)
        whh = jnp.pad(whh, ((0, 0), (0, Gp - 4 * H))).astype(jnp.bfloat16)
        bias = (params[f"b_ih_l{l}"] + params[f"b_hh_l{l}"]).astype(jnp.float32)
        bias = jnp.pad(bias.reshape(1, 4 * H), ((0, 0), (0, Gp - 4 * H)))
        weight_args += [wih, whh, bias]
        weight_specs += [
            pl.BlockSpec((in_dim, Gp), lambda j: (0, 0)),
            pl.BlockSpec((H, Gp), lambda j: (0, 0)),
            pl.BlockSpec((1, Gp), lambda j: (0, 0)),
        ]

    # --- Linear weights (bf16 weight, f32 bias), padded to vocab tiles -------
    lw = jnp.pad(jnp.asarray(params["lin_w"], jnp.float32).T,
                 ((0, 0), (0, Vp - V))).astype(jnp.bfloat16)         # (H, Vp)
    lb = jnp.pad(jnp.asarray(params["lin_b"], jnp.float32).reshape(1, V),
                 ((0, 0), (0, Vp - V)))                              # (1, Vp)

    unroll_time = Tt <= 16
    kernel = make_decoder_kernel(Tt, Bp, H, num_layers, NVT, unroll_time)

    out_full = pl.pallas_call(
        kernel,
        out_shape=jax.ShapeDtypeStruct((Tt * Bp, Vp), jnp.float32),
        grid=(NVT,),
        in_specs=[pl.BlockSpec((Tt * Bp, E), lambda j: (0, 0))]
                + weight_specs
                + [pl.BlockSpec((H, TILE_V), lambda j: (0, j)),
                   pl.BlockSpec((1, TILE_V), lambda j: (0, j))],
        out_specs=pl.BlockSpec((Tt * Bp, TILE_V), lambda j: (0, j)),
        scratch_shapes=[
            pltpu.VMEM((Tt * Bp, Gp), jnp.float32),   # hoisted input projection
            pltpu.VMEM((Tt * Bp, H), jnp.float32),    # per-layer hidden states
        ],
        compiler_params=pltpu.CompilerParams(
            dimension_semantics=("arbitrary",),       # scratch shared across vocab tiles
            vmem_limit_bytes=32 * 1024 * 1024,
        ),
    )(x, *weight_args, lw, lb)

    # --- pack_padded_sequence gather: tiny index take (no one-hot matmul) ----
    t_idx, b_idx = packed_order(lengths)
    flat_idx = jnp.asarray(t_idx * Bp + b_idx, jnp.int32)
    return jnp.take(out_full, flat_idx, axis=0)[:, :V]               # (sum(lengths), V)


# ----------------------------------------------------------------------------
# Pure-JAX reference (for correctness check)
# ----------------------------------------------------------------------------
def lstm_layer_ref(x, w_ih, w_hh, b_ih, b_hh):
    T, B, _ = x.shape
    H = w_hh.shape[1]
    h0 = jnp.zeros((B, H), jnp.float32)
    c0 = jnp.zeros((B, H), jnp.float32)

    def step(carry, x_t):
        h, c = carry
        gates = x_t @ w_ih.T + h @ w_hh.T + b_ih + b_hh
        i = jax.nn.sigmoid(gates[:, 0 * H:1 * H])
        f = jax.nn.sigmoid(gates[:, 1 * H:2 * H])
        g = jnp.tanh(gates[:, 2 * H:3 * H])
        o = jax.nn.sigmoid(gates[:, 3 * H:4 * H])
        c = f * c + i * g
        h = o * jnp.tanh(c)
        return (h, c), h

    _, hs = jax.lax.scan(step, (h0, c0), x)
    return hs


def decoder_forward_ref(params, vis_feat, captions, lengths, num_layers):
    emb = params["embedding"][captions]
    inp = jnp.concatenate([vis_feat[:, None, :], emb], axis=1)
    x = jnp.transpose(inp, (1, 0, 2)).astype(jnp.float32)
    for l in range(num_layers):
        x = lstm_layer_ref(x, params[f"w_ih_l{l}"], params[f"w_hh_l{l}"],
                           params[f"b_ih_l{l}"], params[f"b_hh_l{l}"])
    t_idx, b_idx = packed_order(lengths)
    packed = x[t_idx, b_idx]
    return packed @ params["lin_w"].T + params["lin_b"]


# ----------------------------------------------------------------------------
# Main
# ----------------------------------------------------------------------------
if __name__ == "__main__":
    # config: max_words=8, embed_dim=32, hidden_dim=32, num_layers=2, dropout=0.1
    B, max_words, E, H, V, num_layers = 2, 8, 32, 32, 40, 2

    key = jax.random.PRNGKey(0)
    ks = jax.random.split(key, 16)

    params = {
        "embedding": 0.1 * jax.random.normal(ks[0], (V, E), jnp.float32),
        "lin_w": 0.1 * jax.random.normal(ks[1], (V, H), jnp.float32),
        "lin_b": 0.1 * jax.random.normal(ks[2], (V,), jnp.float32),
    }
    kidx = 3
    for l in range(num_layers):
        in_dim = E if l == 0 else H
        params[f"w_ih_l{l}"] = 0.1 * jax.random.normal(ks[kidx + 0], (4 * H, in_dim), jnp.float32)
        params[f"w_hh_l{l}"] = 0.1 * jax.random.normal(ks[kidx + 1], (4 * H, H), jnp.float32)
        params[f"b_ih_l{l}"] = 0.1 * jax.random.normal(ks[kidx + 2], (4 * H,), jnp.float32)
        params[f"b_hh_l{l}"] = 0.1 * jax.random.normal(ks[kidx + 3], (4 * H,), jnp.float32)
        kidx += 4

    vis_feat = jax.random.normal(ks[kidx], (B, E), jnp.float32)
    captions = jax.random.randint(ks[kidx + 1], (B, max_words), 0, V)
    lengths = [9, 7]  # sorted descending, <= max_words + 1 (visual feature prepended)

    out = decoder_forward(params, vis_feat, captions, lengths, num_layers)
    out = jax.block_until_ready(out)

    ref = decoder_forward_ref(params, vis_feat, captions, lengths, num_layers)
    assert out.shape == (sum(lengths), V), out.shape
    # bf16 MXU operands (f32 accumulation / carries) -> relaxed parity tolerance.
    np.testing.assert_allclose(np.asarray(out), np.asarray(ref), rtol=5e-2, atol=2e-2)

    print("KERNEL_OK")
</pallas_src>

<mosaic_0001>
module attributes {stable_mosaic.version = 11 : i64} {
  func.func @kernel(%arg0: i32, %arg1: memref<72x32xbf16, #tpu.memory_space<vmem>>, %arg2: memref<32x128xbf16, #tpu.memory_space<vmem>>, %arg3: memref<32x128xbf16, #tpu.memory_space<vmem>>, %arg4: memref<1x128xf32, #tpu.memory_space<vmem>>, %arg5: memref<32x128xbf16, #tpu.memory_space<vmem>>, %arg6: memref<32x128xbf16, #tpu.memory_space<vmem>>, %arg7: memref<1x128xf32, #tpu.memory_space<vmem>>, %arg8: memref<32x128xbf16, #tpu.memory_space<vmem>>, %arg9: memref<1x128xf32, #tpu.memory_space<vmem>>, %arg10: memref<72x128xf32, #tpu.memory_space<vmem>>, %arg11: memref<72x128xf32, #tpu.memory_space<vmem>>, %arg12: memref<72x32xf32, #tpu.memory_space<vmem>>) attributes {dimension_semantics = [#tpu.dimension_semantics<arbitrary>], iteration_bounds = array<i64: 1>, scalar_prefetch = 0 : i64, scratch_operands = 2 : i64, tpu.core_type = #tpu.core_type<tc>, window_params = [{pipeline_mode = #tpu.pipeline_mode<synchronous>, transform_indices = @transform_0, window_bounds = array<i64: 72, 32>}, {pipeline_mode = #tpu.pipeline_mode<synchronous>, transform_indices = @transform_1, window_bounds = array<i64: 32, 128>}, {pipeline_mode = #tpu.pipeline_mode<synchronous>, transform_indices = @transform_2, window_bounds = array<i64: 32, 128>}, {pipeline_mode = #tpu.pipeline_mode<synchronous>, transform_indices = @transform_3, window_bounds = array<i64: 1, 128>}, {pipeline_mode = #tpu.pipeline_mode<synchronous>, transform_indices = @transform_4, window_bounds = array<i64: 32, 128>}, {pipeline_mode = #tpu.pipeline_mode<synchronous>, transform_indices = @transform_5, window_bounds = array<i64: 32, 128>}, {pipeline_mode = #tpu.pipeline_mode<synchronous>, transform_indices = @transform_6, window_bounds = array<i64: 1, 128>}, {transform_indices = @transform_7, window_bounds = array<i64: 32, 128>}, {transform_indices = @transform_8, window_bounds = array<i64: 1, 128>}, {transform_indices = @transform_9, window_bounds = array<i64: 72, 128>}]} {
    %c0 = arith.constant 0 : index
    %c0_0 = arith.constant 0 : index
    %0 = vector.load %arg1[%c0, %c0_0] : memref<72x32xbf16, #tpu.memory_space<vmem>>, vector<72x32xbf16>
    %c0_1 = arith.constant 0 : index
    %c0_2 = arith.constant 0 : index
    %1 = vector.load %arg2[%c0_1, %c0_2] : memref<32x128xbf16, #tpu.memory_space<vmem>>, vector<32x128xbf16>
    %cst = arith.constant dense<0.000000e+00> : vector<72x128xf32>
    %2 = tpu.matmul %0, %1, %cst {dimension_numbers = #tpu.dot_dimension_numbers<[1], [0], [0], [1], [0, 0, 1, 1], [], []>} : vector<72x32xbf16>, vector<32x128xbf16>, vector<72x128xf32> -> vector<72x128xf32>
    %c0_3 = arith.constant 0 : index
    %c0_4 = arith.constant 0 : index
    %3 = vector.load %arg4[%c0_3, %c0_4] : memref<1x128xf32, #tpu.memory_space<vmem>>, vector<1x128xf32>
    %4 = vector.broadcast %3 : vector<1x128xf32> to vector<72x128xf32>
    %5 = arith.addf %2, %4 : vector<72x128xf32>
    %c0_5 = arith.constant 0 : index
    %c0_6 = arith.constant 0 : index
    %6 = vector.load %arg11[%c0_5, %c0_6] : memref<72x128xf32, #tpu.memory_space<vmem>>, vector<72x128xf32>
    tpu.vector_store %arg11[%c0_5, %c0_6], %5 {strides = array<i32>} : memref<72x128xf32, #tpu.memory_space<vmem>>, vector<72x128xf32>,
    %c0_7 = arith.constant 0 : index
    %c0_8 = arith.constant 0 : index
    %7 = vector.load %arg3[%c0_7, %c0_8] : memref<32x128xbf16, #tpu.memory_space<vmem>>, vector<32x128xbf16>
    %cst_9 = arith.constant 0.000000e+00 : f32
    %8 = vector.broadcast %cst_9 : f32 to vector<8x32xf32>
    %cst_10 = arith.constant 0.000000e+00 : f32
    %9 = vector.broadcast %cst_10 : f32 to vector<8x32xf32>
    %c0_11 = arith.constant 0 : index
    %c0_12 = arith.constant 0 : index
    %10 = vector.load %arg11[%c0_11, %c0_12] : memref<72x128xf32, #tpu.memory_space<vmem>>, vector<8x128xf32>
    %11 = arith.truncf %8 : vector<8x32xf32> to vector<8x32xbf16>
    %cst_13 = arith.constant dense<0.000000e+00> : vector<8x128xf32>
    %12 = tpu.matmul %11, %7, %cst_13 {dimension_numbers = #tpu.dot_dimension_numbers<[1], [0], [0], [1], [0, 0, 1, 1], [], []>} : vector<8x32xbf16>, vector<32x128xbf16>, vector<8x128xf32> -> vector<8x128xf32>
    %13 = arith.addf %10, %12 : vector<8x128xf32>
    %14 = arith.negf %13 : vector<8x128xf32>
    %15 = math.exp %14 : vector<8x128xf32>
    %cst_14 = arith.constant 1.000000e+00 : f32
    %16 = vector.broadcast %cst_14 : f32 to vector<8x128xf32>
    %17 = arith.addf %16, %15 : vector<8x128xf32>
    %18 = arith.divf %16, %17 : vector<8x128xf32>
    %19 = math.tanh %13 : vector<8x128xf32>
    %20 = vector.extract_strided_slice %18 {offsets = [0, 0], sizes = [8, 32], strides = [1, 1]} : vector<8x128xf32> to vector<8x32xf32>
    %21 = vector.extract_strided_slice %18 {offsets = [0, 32], sizes = [8, 32], strides = [1, 1]} : vector<8x128xf32> to vector<8x32xf32>
    %22 = vector.extract_strided_slice %19 {offsets = [0, 64], sizes = [8, 32], strides = [1, 1]} : vector<8x128xf32> to vector<8x32xf32>
    %23 = vector.extract_strided_slice %18 {offsets = [0, 96], sizes = [8, 32], strides = [1, 1]} : vector<8x128xf32> to vector<8x32xf32>
    %24 = arith.mulf %21, %9 : vector<8x32xf32>
    %25 = arith.mulf %20, %22 : vector<8x32xf32>
    %26 = arith.addf %24, %25 : vector<8x32xf32>
    %27 = math.tanh %26 : vector<8x32xf32>
    %28 = arith.mulf %23, %27 : vector<8x32xf32>
    %c0_15 = arith.constant 0 : index
    %c0_16 = arith.constant 0 : index
    %29 = vector.load %arg12[%c0_15, %c0_16] : memref<72x32xf32, #tpu.memory_space<vmem>>, vector<8x32xf32>
    tpu.vector_store %arg12[%c0_15, %c0_16], %28 {strides = array<i32>} : memref<72x32xf32, #tpu.memory_space<vmem>>, vector<8x32xf32>,
    %c8 = arith.constant 8 : index
    %c0_17 = arith.constant 0 : index
    %30 = vector.load %arg11[%c8, %c0_17] : memref<72x128xf32, #tpu.memory_space<vmem>>, vector<8x128xf32>
    %31 = arith.truncf %28 : vector<8x32xf32> to vector<8x32xbf16>
    %cst_18 = arith.constant dense<0.000000e+00> : vector<8x128xf32>
    %32 = tpu.matmul %31, %7, %cst_18 {dimension_numbers = #tpu.dot_dimension_numbers<[1], [0], [0], [1], [0, 0, 1, 1], [], []>} : vector<8x32xbf16>, vector<32x128xbf16>, vector<8x128xf32> -> vector<8x128xf32>
    %33 = arith.addf %30, %32 : vector<8x128xf32>
    %34 = arith.negf %33 : vector<8x128xf32>
    %35 = math.exp %34 : vector<8x128xf32>
    %cst_19 = arith.constant 1.000000e+00 : f32
    %36 = vector.broadcast %cst_19 : f32 to vector<8x128xf32>
    %37 = arith.addf %36, %35 : vector<8x128xf32>
    %38 = arith.divf %36, %37 : vector<8x128xf32>
    %39 = math.tanh %33 : vector<8x128xf32>
    %40 = vector.extract_strided_slice %38 {offsets = [0, 0], sizes = [8, 32], strides = [1, 1]} : vector<8x128xf32> to vector<8x32xf32>
    %41 = vector.extract_strided_slice %38 {offsets = [0, 32], sizes = [8, 32], strides = [1, 1]} : vector<8x128xf32> to vector<8x32xf32>
    %42 = vector.extract_strided_slice %39 {offsets = [0, 64], sizes = [8, 32], strides = [1, 1]} : vector<8x128xf32> to vector<8x32xf32>
    %43 = vector.extract_strided_slice %38 {offsets = [0, 96], sizes = [8, 32], strides = [1, 1]} : vector<8x128xf32> to vector<8x32xf32>
    %44 = arith.mulf %41, %26 : vector<8x32xf32>
    %45 = arith.mulf %40, %42 : vector<8x32xf32>
    %46 = arith.addf %44, %45 : vector<8x32xf32>
    %47 = math.tanh %46 : vector<8x32xf32>
    %48 = arith.mulf %43, %47 : vector<8x32xf32>
    %c8_20 = arith.constant 8 : index
    %c0_21 = arith.constant 0 : index
    %49 = vector.load %arg12[%c8_20, %c0_21] : memref<72x32xf32, #tpu.memory_space<vmem>>, vector<8x32xf32>
    tpu.vector_store %arg12[%c8_20, %c0_21], %48 {strides = array<i32>} : memref<72x32xf32, #tpu.memory_space<vmem>>, vector<8x32xf32>,
    %c16 = arith.constant 16 : index
    %c0_22 = arith.constant 0 : index
    %50 = vector.load %arg11[%c16, %c0_22] : memref<72x128xf32, #tpu.memory_space<vmem>>, vector<8x128xf32>
    %51 = arith.truncf %48 : vector<8x32xf32> to vector<8x32xbf16>
    %cst_23 = arith.constant dense<0.000000e+00> : vector<8x128xf32>
    %52 = tpu.matmul %51, %7, %cst_23 {dimension_numbers = #tpu.dot_dimension_numbers<[1], [0], [0], [1], [0, 0, 1, 1], [], []>} : vector<8x32xbf16>, vector<32x128xbf16>, vector<8x128xf32> -> vector<8x128xf32>
    %53 = arith.addf %50, %52 : vector<8x128xf32>
    %54 = arith.negf %53 : vector<8x128xf32>
    %55 = math.exp %54 : vector<8x128xf32>
    %cst_24 = arith.constant 1.000000e+00 : f32
    %56 = vector.broadcast %cst_24 : f32 to vector<8x128xf32>
    %57 = arith.addf %56, %55 : vector<8x128xf32>
    %58 = arith.divf %56, %57 : vector<8x128xf32>
    %59 = math.tanh %53 : vector<8x128xf32>
    %60 = vector.extract_strided_slice %58 {offsets = [0, 0], sizes = [8, 32], strides = [1, 1]} : vector<8x128xf32> to vector<8x32xf32>
    %61 = vector.extract_strided_slice %58 {offsets = [0, 32], sizes = [8, 32], strides = [1, 1]} : vector<8x128xf32> to vector<8x32xf32>
    %62 = vector.extract_strided_slice %59 {offsets = [0, 64], sizes = [8, 32], strides = [1, 1]} : vector<8x128xf32> to vector<8x32xf32>
    %63 = vector.extract_strided_slice %58 {offsets = [0, 96], sizes = [8, 32], strides = [1, 1]} : vector<8x128xf32> to vector<8x32xf32>
    %64 = arith.mulf %61, %46 : vector<8x32xf32>
    %65 = arith.mulf %60, %62 : vector<8x32xf32>
    %66 = arith.addf %64, %65 : vector<8x32xf32>
    %67 = math.tanh %66 : vector<8x32xf32>
    %68 = arith.mulf %63, %67 : vector<8x32xf32>
    %c16_25 = arith.constant 16 : index
    %c0_26 = arith.constant 0 : index
    %69 = vector.load %arg12[%c16_25, %c0_26] : memref<72x32xf32, #tpu.memory_space<vmem>>, vector<8x32xf32>
    tpu.vector_store %arg12[%c16_25, %c0_26], %68 {strides = array<i32>} : memref<72x32xf32, #tpu.memory_space<vmem>>, vector<8x32xf32>,
    %c24 = arith.constant 24 : index
    %c0_27 = arith.constant 0 : index
    %70 = vector.load %arg11[%c24, %c0_27] : memref<72x128xf32, #tpu.memory_space<vmem>>, vector<8x128xf32>
    %71 = arith.truncf %68 : vector<8x32xf32> to vector<8x32xbf16>
    %cst_28 = arith.constant dense<0.000000e+00> : vector<8x128xf32>
    %72 = tpu.matmul %71, %7, %cst_28 {dimension_numbers = #tpu.dot_dimension_numbers<[1], [0], [0], [1], [0, 0, 1, 1], [], []>} : vector<8x32xbf16>, vector<32x128xbf16>, vector<8x128xf32> -> vector<8x128xf32>
    %73 = arith.addf %70, %72 : vector<8x128xf32>
    %74 = arith.negf %73 : vector<8x128xf32>
    %75 = math.exp %74 : vector<8x128xf32>
    %cst_29 = arith.constant 1.000000e+00 : f32
    %76 = vector.broadcast %cst_29 : f32 to vector<8x128xf32>
    %77 = arith.addf %76, %75 : vector<8x128xf32>
    %78 = arith.divf %76, %77 : vector<8x128xf32>
    %79 = math.tanh %73 : vector<8x128xf32>
    %80 = vector.extract_strided_slice %78 {offsets = [0, 0], sizes = [8, 32], strides = [1, 1]} : vector<8x128xf32> to vector<8x32xf32>
    %81 = vector.extract_strided_slice %78 {offsets = [0, 32], sizes = [8, 32], strides = [1, 1]} : vector<8x128xf32> to vector<8x32xf32>
    %82 = vector.extract_strided_slice %79 {offsets = [0, 64], sizes = [8, 32], strides = [1, 1]} : vector<8x128xf32> to vector<8x32xf32>
    %83 = vector.extract_strided_slice %78 {offsets = [0, 96], sizes = [8, 32], strides = [1, 1]} : vector<8x128xf32> to vector<8x32xf32>
    %84 = arith.mulf %81, %66 : vector<8x32xf32>
    %85 = arith.mulf %80, %82 : vector<8x32xf32>
    %86 = arith.addf %84, %85 : vector<8x32xf32>
    %87 = math.tanh %86 : vector<8x32xf32>
    %88 = arith.mulf %83, %87 : vector<8x32xf32>
    %c24_30 = arith.constant 24 : index
    %c0_31 = arith.constant 0 : index
    %89 = vector.load %arg12[%c24_30, %c0_31] : memref<72x32xf32, #tpu.memory_space<vmem>>, vector<8x32xf32>
    tpu.vector_store %arg12[%c24_30, %c0_31], %88 {strides = array<i32>} : memref<72x32xf32, #tpu.memory_space<vmem>>, vector<8x32xf32>,
    %c32 = arith.constant 32 : index
    %c0_32 = arith.constant 0 : index
    %90 = vector.load %arg11[%c32, %c0_32] : memref<72x128xf32, #tpu.memory_space<vmem>>, vector<8x128xf32>
    %91 = arith.truncf %88 : vector<8x32xf32> to vector<8x32xbf16>
    %cst_33 = arith.constant dense<0.000000e+00> : vector<8x128xf32>
    %92 = tpu.matmul %91, %7, %cst_33 {dimension_numbers = #tpu.dot_dimension_numbers<[1], [0], [0], [1], [0, 0, 1, 1], [], []>} : vector<8x32xbf16>, vector<32x128xbf16>, vector<8x128xf32> -> vector<8x128xf32>
    %93 = arith.addf %90, %92 : vector<8x128xf32>
    %94 = arith.negf %93 : vector<8x128xf32>
    %95 = math.exp %94 : vector<8x128xf32>
    %cst_34 = arith.constant 1.000000e+00 : f32
    %96 = vector.broadcast %cst_34 : f32 to vector<8x128xf32>
    %97 = arith.addf %96, %95 : vector<8x128xf32>
    %98 = arith.divf %96, %97 : vector<8x128xf32>
    %99 = math.tanh %93 : vector<8x128xf32>
    %100 = vector.extract_strided_slice %98 {offsets = [0, 0], sizes = [8, 32], strides = [1, 1]} : vector<8x128xf32> to vector<8x32xf32>
    %101 = vector.extract_strided_slice %98 {offsets = [0, 32], sizes = [8, 32], strides = [1, 1]} : vector<8x128xf32> to vector<8x32xf32>
    %102 = vector.extract_strided_slice %99 {offsets = [0, 64], sizes = [8, 32], strides = [1, 1]} : vector<8x128xf32> to vector<8x32xf32>
    %103 = vector.extract_strided_slice %98 {offsets = [0, 96], sizes = [8, 32], strides = [1, 1]} : vector<8x128xf32> to vector<8x32xf32>
    %104 = arith.mulf %101, %86 : vector<8x32xf32>
    %105 = arith.mulf %100, %102 : vector<8x32xf32>
    %106 = arith.addf %104, %105 : vector<8x32xf32>
    %107 = math.tanh %106 : vector<8x32xf32>
    %108 = arith.mulf %103, %107 : vector<8x32xf32>
    %c32_35 = arith.constant 32 : index
    %c0_36 = arith.constant 0 : index
    %109 = vector.load %arg12[%c32_35, %c0_36] : memref<72x32xf32, #tpu.memory_space<vmem>>, vector<8x32xf32>
    tpu.vector_store %arg12[%c32_35, %c0_36], %108 {strides = array<i32>} : memref<72x32xf32, #tpu.memory_space<vmem>>, vector<8x32xf32>,
    %c40 = arith.constant 40 : index
    %c0_37 = arith.constant 0 : index
    %110 = vector.load %arg11[%c40, %c0_37] : memref<72x128xf32, #tpu.memory_space<vmem>>, vector<8x128xf32>
    %111 = arith.truncf %108 : vector<8x32xf32> to vector<8x32xbf16>
    %cst_38 = arith.constant dense<0.000000e+00> : vector<8x128xf32>
    %112 = tpu.matmul %111, %7, %cst_38 {dimension_numbers = #tpu.dot_dimension_numbers<[1], [0], [0], [1], [0, 0, 1, 1], [], []>} : vector<8x32xbf16>, vector<32x128xbf16>, vector<8x128xf32> -> vector<8x128xf32>
    %113 = arith.addf %110, %112 : vector<8x128xf32>
    %114 = arith.negf %113 : vector<8x128xf32>
    %115 = math.exp %114 : vector<8x128xf32>
    %cst_39 = arith.constant 1.000000e+00 : f32
    %116 = vector.broadcast %cst_39 : f32 to vector<8x128xf32>
    %117 = arith.addf %116, %115 : vector<8x128xf32>
    %118 = arith.divf %116, %117 : vector<8x128xf32>
    %119 = math.tanh %113 : vector<8x128xf32>
    %120 = vector.extract_strided_slice %118 {offsets = [0, 0], sizes = [8, 32], strides = [1, 1]} : vector<8x128xf32> to vector<8x32xf32>
    %121 = vector.extract_strided_slice %118 {offsets = [0, 32], sizes = [8, 32], strides = [1, 1]} : vector<8x128xf32> to vector<8x32xf32>
    %122 = vector.extract_strided_slice %119 {offsets = [0, 64], sizes = [8, 32], strides = [1, 1]} : vector<8x128xf32> to vector<8x32xf32>
    %123 = vector.extract_strided_slice %118 {offsets = [0, 96], sizes = [8, 32], strides = [1, 1]} : vector<8x128xf32> to vector<8x32xf32>
    %124 = arith.mulf %121, %106 : vector<8x32xf32>
    %125 = arith.mulf %120, %122 : vector<8x32xf32>
    %126 = arith.addf %124, %125 : vector<8x32xf32>
    %127 = math.tanh %126 : vector<8x32xf32>
    %128 = arith.mulf %123, %127 : vector<8x32xf32>
    %c40_40 = arith.constant 40 : index
    %c0_41 = arith.constant 0 : index
    %129 = vector.load %arg12[%c40_40, %c0_41] : memref<72x32xf32, #tpu.memory_space<vmem>>, vector<8x32xf32>
    tpu.vector_store %arg12[%c40_40, %c0_41], %128 {strides = array<i32>} : memref<72x32xf32, #tpu.memory_space<vmem>>, vector<8x32xf32>,
    %c48 = arith.constant 48 : index
    %c0_42 = arith.constant 0 : index
    %130 = vector.load %arg11[%c48, %c0_42] : memref<72x128xf32, #tpu.memory_space<vmem>>, vector<8x128xf32>
    %131 = arith.truncf %128 : vector<8x32xf32> to vector<8x32xbf16>
    %cst_43 = arith.constant dense<0.000000e+00> : vector<8x128xf32>
    %132 = tpu.matmul %131, %7, %cst_43 {dimension_numbers = #tpu.dot_dimension_numbers<[1], [0], [0], [1], [0, 0, 1, 1], [], []>} : vector<8x32xbf16>, vector<32x128xbf16>, vector<8x128xf32> -> vector<8x128xf32>
    %133 = arith.addf %130, %132 : vector<8x128xf32>
    %134 = arith.negf %133 : vector<8x128xf32>
    %135 = math.exp %134 : vector<8x128xf32>
    %cst_44 = arith.constant 1.000000e+00 : f32
    %136 = vector.broadcast %cst_44 : f32 to vector<8x128xf32>
    %137 = arith.addf %136, %135 : vector<8x128xf32>
    %138 = arith.divf %136, %137 : vector<8x128xf32>
    %139 = math.tanh %133 : vector<8x128xf32>
    %140 = vector.extract_strided_slice %138 {offsets = [0, 0], sizes = [8, 32], strides = [1, 1]} : vector<8x128xf32> to vector<8x32xf32>
    %141 = vector.extract_strided_slice %138 {offsets = [0, 32], sizes = [8, 32], strides = [1, 1]} : vector<8x128xf32> to vector<8x32xf32>
    %142 = vector.extract_strided_slice %139 {offsets = [0, 64], sizes = [8, 32], strides = [1, 1]} : vector<8x128xf32> to vector<8x32xf32>
    %143 = vector.extract_strided_slice %138 {offsets = [0, 96], sizes = [8, 32], strides = [1, 1]} : vector<8x128xf32> to vector<8x32xf32>
    %144 = arith.mulf %141, %126 : vector<8x32xf32>
    %145 = arith.mulf %140, %142 : vector<8x32xf32>
    %146 = arith.addf %144, %145 : vector<8x32xf32>
    %147 = math.tanh %146 : vector<8x32xf32>
    %148 = arith.mulf %143, %147 : vector<8x32xf32>
    %c48_45 = arith.constant 48 : index
    %c0_46 = arith.constant 0 : index
    %149 = vector.load %arg12[%c48_45, %c0_46] : memref<72x32xf32, #tpu.memory_space<vmem>>, vector<8x32xf32>
    tpu.vector_store %arg12[%c48_45, %c0_46], %148 {strides = array<i32>} : memref<72x32xf32, #tpu.memory_space<vmem>>, vector<8x32xf32>,
    %c56 = arith.constant 56 : index
    %c0_47 = arith.constant 0 : index
    %150 = vector.load %arg11[%c56, %c0_47] : memref<72x128xf32, #tpu.memory_space<vmem>>, vector<8x128xf32>
    %151 = arith.truncf %148 : vector<8x32xf32> to vector<8x32xbf16>
    %cst_48 = arith.constant dense<0.000000e+00> : vector<8x128xf32>
    %152 = tpu.matmul %151, %7, %cst_48 {dimension_numbers = #tpu.dot_dimension_numbers<[1], [0], [0], [1], [0, 0, 1, 1], [], []>} : vector<8x32xbf16>, vector<32x128xbf16>, vector<8x128xf32> -> vector<8x128xf32>
    %153 = arith.addf %150, %152 : vector<8x128xf32>
    %154 = arith.negf %153 : vector<8x128xf32>
    %155 = math.exp %154 : vector<8x128xf32>
    %cst_49 = arith.constant 1.000000e+00 : f32
    %156 = vector.broadcast %cst_49 : f32 to vector<8x128xf32>
    %157 = arith.addf %156, %155 : vector<8x128xf32>
    %158 = arith.divf %156, %157 : vector<8x128xf32>
    %159 = math.tanh %153 : vector<8x128xf32>
    %160 = vector.extract_strided_slice %158 {offsets = [0, 0], sizes = [8, 32], strides = [1, 1]} : vector<8x128xf32> to vector<8x32xf32>
    %161 = vector.extract_strided_slice %158 {offsets = [0, 32], sizes = [8, 32], strides = [1, 1]} : vector<8x128xf32> to vector<8x32xf32>
    %162 = vector.extract_strided_slice %159 {offsets = [0, 64], sizes = [8, 32], strides = [1, 1]} : vector<8x128xf32> to vector<8x32xf32>
    %163 = vector.extract_strided_slice %158 {offsets = [0, 96], sizes = [8, 32], strides = [1, 1]} : vector<8x128xf32> to vector<8x32xf32>
    %164 = arith.mulf %161, %146 : vector<8x32xf32>
    %165 = arith.mulf %160, %162 : vector<8x32xf32>
    %166 = arith.addf %164, %165 : vector<8x32xf32>
    %167 = math.tanh %166 : vector<8x32xf32>
    %168 = arith.mulf %163, %167 : vector<8x32xf32>
    %c56_50 = arith.constant 56 : index
    %c0_51 = arith.constant 0 : index
    %169 = vector.load %arg12[%c56_50, %c0_51] : memref<72x32xf32, #tpu.memory_space<vmem>>, vector<8x32xf32>
    tpu.vector_store %arg12[%c56_50, %c0_51], %168 {strides = array<i32>} : memref<72x32xf32, #tpu.memory_space<vmem>>, vector<8x32xf32>,
    %c64 = arith.constant 64 : index
    %c0_52 = arith.constant 0 : index
    %170 = vector.load %arg11[%c64, %c0_52] : memref<72x128xf32, #tpu.memory_space<vmem>>, vector<8x128xf32>
    %171 = arith.truncf %168 : vector<8x32xf32> to vector<8x32xbf16>
    %cst_53 = arith.constant dense<0.000000e+00> : vector<8x128xf32>
    %172 = tpu.matmul %171, %7, %cst_53 {dimension_numbers = #tpu.dot_dimension_numbers<[1], [0], [0], [1], [0, 0, 1, 1], [], []>} : vector<8x32xbf16>, vector<32x128xbf16>, vector<8x128xf32> -> vector<8x128xf32>
    %173 = arith.addf %170, %172 : vector<8x128xf32>
    %174 = arith.negf %173 : vector<8x128xf32>
    %175 = math.exp %174 : vector<8x128xf32>
    %cst_54 = arith.constant 1.000000e+00 : f32
    %176 = vector.broadcast %cst_54 : f32 to vector<8x128xf32>
    %177 = arith.addf %176, %175 : vector<8x128xf32>
    %178 = arith.divf %176, %177 : vector<8x128xf32>
    %179 = math.tanh %173 : vector<8x128xf32>
    %180 = vector.extract_strided_slice %178 {offsets = [0, 0], sizes = [8, 32], strides = [1, 1]} : vector<8x128xf32> to vector<8x32xf32>
    %181 = vector.extract_strided_slice %178 {offsets = [0, 32], sizes = [8, 32], strides = [1, 1]} : vector<8x128xf32> to vector<8x32xf32>
    %182 = vector.extract_strided_slice %179 {offsets = [0, 64], sizes = [8, 32], strides = [1, 1]} : vector<8x128xf32> to vector<8x32xf32>
    %183 = vector.extract_strided_slice %178 {offsets = [0, 96], sizes = [8, 32], strides = [1, 1]} : vector<8x128xf32> to vector<8x32xf32>
    %184 = arith.mulf %181, %166 : vector<8x32xf32>
    %185 = arith.mulf %180, %182 : vector<8x32xf32>
    %186 = arith.addf %184, %185 : vector<8x32xf32>
    %187 = math.tanh %186 : vector<8x32xf32>
    %188 = arith.mulf %183, %187 : vector<8x32xf32>
    %c64_55 = arith.constant 64 : index
    %c0_56 = arith.constant 0 : index
    %189 = vector.load %arg12[%c64_55, %c0_56] : memref<72x32xf32, #tpu.memory_space<vmem>>, vector<8x32xf32>
    tpu.vector_store %arg12[%c64_55, %c0_56], %188 {strides = array<i32>} : memref<72x32xf32, #tpu.memory_space<vmem>>, vector<8x32xf32>,
    %c0_57 = arith.constant 0 : index
    %c0_58 = arith.constant 0 : index
    %190 = vector.load %arg12[%c0_57, %c0_58] : memref<72x32xf32, #tpu.memory_space<vmem>>, vector<72x32xf32>
    %191 = arith.truncf %190 : vector<72x32xf32> to vector<72x32xbf16>
    %c0_59 = arith.constant 0 : index
    %c0_60 = arith.constant 0 : index
    %192 = vector.load %arg5[%c0_59, %c0_60] : memref<32x128xbf16, #tpu.memory_space<vmem>>, vector<32x128xbf16>
    %cst_61 = arith.constant dense<0.000000e+00> : vector<72x128xf32>
    %193 = tpu.matmul %191, %192, %cst_61 {dimension_numbers = #tpu.dot_dimension_numbers<[1], [0], [0], [1], [0, 0, 1, 1], [], []>} : vector<72x32xbf16>, vector<32x128xbf16>, vector<72x128xf32> -> vector<72x128xf32>
    %c0_62 = arith.constant 0 : index
    %c0_63 = arith.constant 0 : index
    %194 = vector.load %arg7[%c0_62, %c0_63] : memref<1x128xf32, #tpu.memory_space<vmem>>, vector<1x128xf32>
    %195 = vector.broadcast %194 : vector<1x128xf32> to vector<72x128xf32>
    %196 = arith.addf %193, %195 : vector<72x128xf32>
    %c0_64 = arith.constant 0 : index
    %c0_65 = arith.constant 0 : index
    %197 = vector.load %arg11[%c0_64, %c0_65] : memref<72x128xf32, #tpu.memory_space<vmem>>, vector<72x128xf32>
    tpu.vector_store %arg11[%c0_64, %c0_65], %196 {strides = array<i32>} : memref<72x128xf32, #tpu.memory_space<vmem>>, vector<72x128xf32>,
    %c0_66 = arith.constant 0 : index
    %c0_67 = arith.constant 0 : index
    %198 = vector.load %arg6[%c0_66, %c0_67] : memref<32x128xbf16, #tpu.memory_space<vmem>>, vector<32x128xbf16>
    %cst_68 = arith.constant 0.000000e+00 : f32
    %199 = vector.broadcast %cst_68 : f32 to vector<8x32xf32>
    %cst_69 = arith.constant 0.000000e+00 : f32
    %200 = vector.broadcast %cst_69 : f32 to vector<8x32xf32>
    %c0_70 = arith.constant 0 : index
    %c0_71 = arith.constant 0 : index
    %201 = vector.load %arg11[%c0_70, %c0_71] : memref<72x128xf32, #tpu.memory_space<vmem>>, vector<8x128xf32>
    %202 = arith.truncf %199 : vector<8x32xf32> to vector<8x32xbf16>
    %cst_72 = arith.constant dense<0.000000e+00> : vector<8x128xf32>
    %203 = tpu.matmul %202, %198, %cst_72 {dimension_numbers = #tpu.dot_dimension_numbers<[1], [0], [0], [1], [0, 0, 1, 1], [], []>} : vector<8x32xbf16>, vector<32x128xbf16>, vector<8x128xf32> -> vector<8x128xf32>
    %204 = arith.addf %201, %203 : vector<8x128xf32>
    %205 = arith.negf %204 : vector<8x128xf32>
    %206 = math.exp %205 : vector<8x128xf32>
    %cst_73 = arith.constant 1.000000e+00 : f32
    %207 = vector.broadcast %cst_73 : f32 to vector<8x128xf32>
    %208 = arith.addf %207, %206 : vector<8x128xf32>
    %209 = arith.divf %207, %208 : vector<8x128xf32>
    %210 = math.tanh %204 : vector<8x128xf32>
    %211 = vector.extract_strided_slice %209 {offsets = [0, 0], sizes = [8, 32], strides = [1, 1]} : vector<8x128xf32> to vector<8x32xf32>
    %212 = vector.extract_strided_slice %209 {offsets = [0, 32], sizes = [8, 32], strides = [1, 1]} : vector<8x128xf32> to vector<8x32xf32>
    %213 = vector.extract_strided_slice %210 {offsets = [0, 64], sizes = [8, 32], strides = [1, 1]} : vector<8x128xf32> to vector<8x32xf32>
    %214 = vector.extract_strided_slice %209 {offsets = [0, 96], sizes = [8, 32], strides = [1, 1]} : vector<8x128xf32> to vector<8x32xf32>
    %215 = arith.mulf %212, %200 : vector<8x32xf32>
    %216 = arith.mulf %211, %213 : vector<8x32xf32>
    %217 = arith.addf %215, %216 : vector<8x32xf32>
    %218 = math.tanh %217 : vector<8x32xf32>
    %219 = arith.mulf %214, %218 : vector<8x32xf32>
    %c0_74 = arith.constant 0 : index
    %c0_75 = arith.constant 0 : index
    %220 = vector.load %arg12[%c0_74, %c0_75] : memref<72x32xf32, #tpu.memory_space<vmem>>, vector<8x32xf32>
    tpu.vector_store %arg12[%c0_74, %c0_75], %219 {strides = array<i32>} : memref<72x32xf32, #tpu.memory_space<vmem>>, vector<8x32xf32>,
    %c8_76 = arith.constant 8 : index
    %c0_77 = arith.constant 0 : index
    %221 = vector.load %arg11[%c8_76, %c0_77] : memref<72x128xf32, #tpu.memory_space<vmem>>, vector<8x128xf32>
    %222 = arith.truncf %219 : vector<8x32xf32> to vector<8x32xbf16>
    %cst_78 = arith.constant dense<0.000000e+00> : vector<8x128xf32>
    %223 = tpu.matmul %222, %198, %cst_78 {dimension_numbers = #tpu.dot_dimension_numbers<[1], [0], [0], [1], [0, 0, 1, 1], [], []>} : vector<8x32xbf16>, vector<32x128xbf16>, vector<8x128xf32> -> vector<8x128xf32>
    %224 = arith.addf %221, %223 : vector<8x128xf32>
    %225 = arith.negf %224 : vector<8x128xf32>
    %226 = math.exp %225 : vector<8x128xf32>
    %cst_79 = arith.constant 1.000000e+00 : f32
    %227 = vector.broadcast %cst_79 : f32 to vector<8x128xf32>
    %228 = arith.addf %227, %226 : vector<8x128xf32>
    %229 = arith.divf %227, %228 : vector<8x128xf32>
    %230 = math.tanh %224 : vector<8x128xf32>
    %231 = vector.extract_strided_slice %229 {offsets = [0, 0], sizes = [8, 32], strides = [1, 1]} : vector<8x128xf32> to vector<8x32xf32>
    %232 = vector.extract_strided_slice %229 {offsets = [0, 32], sizes = [8, 32], strides = [1, 1]} : vector<8x128xf32> to vector<8x32xf32>
    %233 = vector.extract_strided_slice %230 {offsets = [0, 64], sizes = [8, 32], strides = [1, 1]} : vector<8x128xf32> to vector<8x32xf32>
    %234 = vector.extract_strided_slice %229 {offsets = [0, 96], sizes = [8, 32], strides = [1, 1]} : vector<8x128xf32> to vector<8x32xf32>
    %235 = arith.mulf %232, %217 : vector<8x32xf32>
    %236 = arith.mulf %231, %233 : vector<8x32xf32>
    %237 = arith.addf %235, %236 : vector<8x32xf32>
    %238 = math.tanh %237 : vector<8x32xf32>
    %239 = arith.mulf %234, %238 : vector<8x32xf32>
    %c8_80 = arith.constant 8 : index
    %c0_81 = arith.constant 0 : index
    %240 = vector.load %arg12[%c8_80, %c0_81] : memref<72x32xf32, #tpu.memory_space<vmem>>, vector<8x32xf32>
    tpu.vector_store %arg12[%c8_80, %c0_81], %239 {strides = array<i32>} : memref<72x32xf32, #tpu.memory_space<vmem>>, vector<8x32xf32>,
    %c16_82 = arith.constant 16 : index
    %c0_83 = arith.constant 0 : index
    %241 = vector.load %arg11[%c16_82, %c0_83] : memref<72x128xf32, #tpu.memory_space<vmem>>, vector<8x128xf32>
    %242 = arith.truncf %239 : vector<8x32xf32> to vector<8x32xbf16>
    %cst_84 = arith.constant dense<0.000000e+00> : vector<8x128xf32>
    %243 = tpu.matmul %242, %198, %cst_84 {dimension_numbers = #tpu.dot_dimension_numbers<[1], [0], [0], [1], [0, 0, 1, 1], [], []>} : vector<8x32xbf16>, vector<32x128xbf16>, vector<8x128xf32> -> vector<8x128xf32>
    %244 = arith.addf %241, %243 : vector<8x128xf32>
    %245 = arith.negf %244 : vector<8x128xf32>
    %246 = math.exp %245 : vector<8x128xf32>
    %cst_85 = arith.constant 1.000000e+00 : f32
    %247 = vector.broadcast %cst_85 : f32 to vector<8x128xf32>
    %248 = arith.addf %247, %246 : vector<8x128xf32>
    %249 = arith.divf %247, %248 : vector<8x128xf32>
    %250 = math.tanh %244 : vector<8x128xf32>
    %251 = vector.extract_strided_slice %249 {offsets = [0, 0], sizes = [8, 32], strides = [1, 1]} : vector<8x128xf32> to vector<8x32xf32>
    %252 = vector.extract_strided_slice %249 {offsets = [0, 32], sizes = [8, 32], strides = [1, 1]} : vector<8x128xf32> to vector<8x32xf32>
    %253 = vector.extract_strided_slice %250 {offsets = [0, 64], sizes = [8, 32], strides = [1, 1]} : vector<8x128xf32> to vector<8x32xf32>
    %254 = vector.extract_strided_slice %249 {offsets = [0, 96], sizes = [8, 32], strides = [1, 1]} : vector<8x128xf32> to vector<8x32xf32>
    %255 = arith.mulf %252, %237 : vector<8x32xf32>
    %256 = arith.mulf %251, %253 : vector<8x32xf32>
    %257 = arith.addf %255, %256 : vector<8x32xf32>
    %258 = math.tanh %257 : vector<8x32xf32>
    %259 = arith.mulf %254, %258 : vector<8x32xf32>
    %c16_86 = arith.constant 16 : index
    %c0_87 = arith.constant 0 : index
    %260 = vector.load %arg12[%c16_86, %c0_87] : memref<72x32xf32, #tpu.memory_space<vmem>>, vector<8x32xf32>
    tpu.vector_store %arg12[%c16_86, %c0_87], %259 {strides = array<i32>} : memref<72x32xf32, #tpu.memory_space<vmem>>, vector<8x32xf32>,
    %c24_88 = arith.constant 24 : index
    %c0_89 = arith.constant 0 : index
    %261 = vector.load %arg11[%c24_88, %c0_89] : memref<72x128xf32, #tpu.memory_space<vmem>>, vector<8x128xf32>
    %262 = arith.truncf %259 : vector<8x32xf32> to vector<8x32xbf16>
    %cst_90 = arith.constant dense<0.000000e+00> : vector<8x128xf32>
    %263 = tpu.matmul %262, %198, %cst_90 {dimension_numbers = #tpu.dot_dimension_numbers<[1], [0], [0], [1], [0, 0, 1, 1], [], []>} : vector<8x32xbf16>, vector<32x128xbf16>, vector<8x128xf32> -> vector<8x128xf32>
    %264 = arith.addf %261, %263 : vector<8x128xf32>
    %265 = arith.negf %264 : vector<8x128xf32>
    %266 = math.exp %265 : vector<8x128xf32>
    %cst_91 = arith.constant 1.000000e+00 : f32
    %267 = vector.broadcast %cst_91 : f32 to vector<8x128xf32>
    %268 = arith.addf %267, %266 : vector<8x128xf32>
    %269 = arith.divf %267, %268 : vector<8x128xf32>
    %270 = math.tanh %264 : vector<8x128xf32>
    %271 = vector.extract_strided_slice %269 {offsets = [0, 0], sizes = [8, 32], strides = [1, 1]} : vector<8x128xf32> to vector<8x32xf32>
    %272 = vector.extract_strided_slice %269 {offsets = [0, 32], sizes = [8, 32], strides = [1, 1]} : vector<8x128xf32> to vector<8x32xf32>
    %273 = vector.extract_strided_slice %270 {offsets = [0, 64], sizes = [8, 32], strides = [1, 1]} : vector<8x128xf32> to vector<8x32xf32>
    %274 = vector.extract_strided_slice %269 {offsets = [0, 96], sizes = [8, 32], strides = [1, 1]} : vector<8x128xf32> to vector<8x32xf32>
    %275 = arith.mulf %272, %257 : vector<8x32xf32>
    %276 = arith.mulf %271, %273 : vector<8x32xf32>
    %277 = arith.addf %275, %276 : vector<8x32xf32>
    %278 = math.tanh %277 : vector<8x32xf32>
    %279 = arith.mulf %274, %278 : vector<8x32xf32>
    %c24_92 = arith.constant 24 : index
    %c0_93 = arith.constant 0 : index
    %280 = vector.load %arg12[%c24_92, %c0_93] : memref<72x32xf32, #tpu.memory_space<vmem>>, vector<8x32xf32>
    tpu.vector_store %arg12[%c24_92, %c0_93], %279 {strides = array<i32>} : memref<72x32xf32, #tpu.memory_space<vmem>>, vector<8x32xf32>,
    %c32_94 = arith.constant 32 : index
    %c0_95 = arith.constant 0 : index
    %281 = vector.load %arg11[%c32_94, %c0_95] : memref<72x128xf32, #tpu.memory_space<vmem>>, vector<8x128xf32>
    %282 = arith.truncf %279 : vector<8x32xf32> to vector<8x32xbf16>
    %cst_96 = arith.constant dense<0.000000e+00> : vector<8x128xf32>
    %283 = tpu.matmul %282, %198, %cst_96 {dimension_numbers = #tpu.dot_dimension_numbers<[1], [0], [0], [1], [0, 0, 1, 1], [], []>} : vector<8x32xbf16>, vector<32x128xbf16>, vector<8x128xf32> -> vector<8x128xf32>
    %284 = arith.addf %281, %283 : vector<8x128xf32>
    %285 = arith.negf %284 : vector<8x128xf32>
    %286 = math.exp %285 : vector<8x128xf32>
    %cst_97 = arith.constant 1.000000e+00 : f32
    %287 = vector.broadcast %cst_97 : f32 to vector<8x128xf32>
    %288 = arith.addf %287, %286 : vector<8x128xf32>
    %289 = arith.divf %287, %288 : vector<8x128xf32>
    %290 = math.tanh %284 : vector<8x128xf32>
    %291 = vector.extract_strided_slice %289 {offsets = [0, 0], sizes = [8, 32], strides = [1, 1]} : vector<8x128xf32> to vector<8x32xf32>
    %292 = vector.extract_strided_slice %289 {offsets = [0, 32], sizes = [8, 32], strides = [1, 1]} : vector<8x128xf32> to vector<8x32xf32>
    %293 = vector.extract_strided_slice %290 {offsets = [0, 64], sizes = [8, 32], strides = [1, 1]} : vector<8x128xf32> to vector<8x32xf32>
    %294 = vector.extract_strided_slice %289 {offsets = [0, 96], sizes = [8, 32], strides = [1, 1]} : vector<8x128xf32> to vector<8x32xf32>
    %295 = arith.mulf %292, %277 : vector<8x32xf32>
    %296 = arith.mulf %291, %293 : vector<8x32xf32>
    %297 = arith.addf %295, %296 : vector<8x32xf32>
    %298 = math.tanh %297 : vector<8x32xf32>
    %299 = arith.mulf %294, %298 : vector<8x32xf32>
    %c32_98 = arith.constant 32 : index
    %c0_99 = arith.constant 0 : index
    %300 = vector.load %arg12[%c32_98, %c0_99] : memref<72x32xf32, #tpu.memory_space<vmem>>, vector<8x32xf32>
    tpu.vector_store %arg12[%c32_98, %c0_99], %299 {strides = array<i32>} : memref<72x32xf32, #tpu.memory_space<vmem>>, vector<8x32xf32>,
    %c40_100 = arith.constant 40 : index
    %c0_101 = arith.constant 0 : index
    %301 = vector.load %arg11[%c40_100, %c0_101] : memref<72x128xf32, #tpu.memory_space<vmem>>, vector<8x128xf32>
    %302 = arith.truncf %299 : vector<8x32xf32> to vector<8x32xbf16>
    %cst_102 = arith.constant dense<0.000000e+00> : vector<8x128xf32>
    %303 = tpu.matmul %302, %198, %cst_102 {dimension_numbers = #tpu.dot_dimension_numbers<[1], [0], [0], [1], [0, 0, 1, 1], [], []>} : vector<8x32xbf16>, vector<32x128xbf16>, vector<8x128xf32> -> vector<8x128xf32>
    %304 = arith.addf %301, %303 : vector<8x128xf32>
    %305 = arith.negf %304 : vector<8x128xf32>
    %306 = math.exp %305 : vector<8x128xf32>
    %cst_103 = arith.constant 1.000000e+00 : f32
    %307 = vector.broadcast %cst_103 : f32 to vector<8x128xf32>
    %308 = arith.addf %307, %306 : vector<8x128xf32>
    %309 = arith.divf %307, %308 : vector<8x128xf32>
    %310 = math.tanh %304 : vector<8x128xf32>
    %311 = vector.extract_strided_slice %309 {offsets = [0, 0], sizes = [8, 32], strides = [1, 1]} : vector<8x128xf32> to vector<8x32xf32>
    %312 = vector.extract_strided_slice %309 {offsets = [0, 32], sizes = [8, 32], strides = [1, 1]} : vector<8x128xf32> to vector<8x32xf32>
    %313 = vector.extract_strided_slice %310 {offsets = [0, 64], sizes = [8, 32], strides = [1, 1]} : vector<8x128xf32> to vector<8x32xf32>
    %314 = vector.extract_strided_slice %309 {offsets = [0, 96], sizes = [8, 32], strides = [1, 1]} : vector<8x128xf32> to vector<8x32xf32>
    %315 = arith.mulf %312, %297 : vector<8x32xf32>
    %316 = arith.mulf %311, %313 : vector<8x32xf32>
    %317 = arith.addf %315, %316 : vector<8x32xf32>
    %318 = math.tanh %317 : vector<8x32xf32>
    %319 = arith.mulf %314, %318 : vector<8x32xf32>
    %c40_104 = arith.constant 40 : index
    %c0_105 = arith.constant 0 : index
    %320 = vector.load %arg12[%c40_104, %c0_105] : memref<72x32xf32, #tpu.memory_space<vmem>>, vector<8x32xf32>
    tpu.vector_store %arg12[%c40_104, %c0_105], %319 {strides = array<i32>} : memref<72x32xf32, #tpu.memory_space<vmem>>, vector<8x32xf32>,
    %c48_106 = arith.constant 48 : index
    %c0_107 = arith.constant 0 : index
    %321 = vector.load %arg11[%c48_106, %c0_107] : memref<72x128xf32, #tpu.memory_space<vmem>>, vector<8x128xf32>
    %322 = arith.truncf %319 : vector<8x32xf32> to vector<8x32xbf16>
    %cst_108 = arith.constant dense<0.000000e+00> : vector<8x128xf32>
    %323 = tpu.matmul %322, %198, %cst_108 {dimension_numbers = #tpu.dot_dimension_numbers<[1], [0], [0], [1], [0, 0, 1, 1], [], []>} : vector<8x32xbf16>, vector<32x128xbf16>, vector<8x128xf32> -> vector<8x128xf32>
    %324 = arith.addf %321, %323 : vector<8x128xf32>
    %325 = arith.negf %324 : vector<8x128xf32>
    %326 = math.exp %325 : vector<8x128xf32>
    %cst_109 = arith.constant 1.000000e+00 : f32
    %327 = vector.broadcast %cst_109 : f32 to vector<8x128xf32>
    %328 = arith.addf %327, %326 : vector<8x128xf32>
    %329 = arith.divf %327, %328 : vector<8x128xf32>
    %330 = math.tanh %324 : vector<8x128xf32>
    %331 = vector.extract_strided_slice %329 {offsets = [0, 0], sizes = [8, 32], strides = [1, 1]} : vector<8x128xf32> to vector<8x32xf32>
    %332 = vector.extract_strided_slice %329 {offsets = [0, 32], sizes = [8, 32], strides = [1, 1]} : vector<8x128xf32> to vector<8x32xf32>
    %333 = vector.extract_strided_slice %330 {offsets = [0, 64], sizes = [8, 32], strides = [1, 1]} : vector<8x128xf32> to vector<8x32xf32>
    %334 = vector.extract_strided_slice %329 {offsets = [0, 96], sizes = [8, 32], strides = [1, 1]} : vector<8x128xf32> to vector<8x32xf32>
    %335 = arith.mulf %332, %317 : vector<8x32xf32>
    %336 = arith.mulf %331, %333 : vector<8x32xf32>
    %337 = arith.addf %335, %336 : vector<8x32xf32>
    %338 = math.tanh %337 : vector<8x32xf32>
    %339 = arith.mulf %334, %338 : vector<8x32xf32>
    %c48_110 = arith.constant 48 : index
    %c0_111 = arith.constant 0 : index
    %340 = vector.load %arg12[%c48_110, %c0_111] : memref<72x32xf32, #tpu.memory_space<vmem>>, vector<8x32xf32>
    tpu.vector_store %arg12[%c48_110, %c0_111], %339 {strides = array<i32>} : memref<72x32xf32, #tpu.memory_space<vmem>>, vector<8x32xf32>,
    %c56_112 = arith.constant 56 : index
    %c0_113 = arith.constant 0 : index
    %341 = vector.load %arg11[%c56_112, %c0_113] : memref<72x128xf32, #tpu.memory_space<vmem>>, vector<8x128xf32>
    %342 = arith.truncf %339 : vector<8x32xf32> to vector<8x32xbf16>
    %cst_114 = arith.constant dense<0.000000e+00> : vector<8x128xf32>
    %343 = tpu.matmul %342, %198, %cst_114 {dimension_numbers = #tpu.dot_dimension_numbers<[1], [0], [0], [1], [0, 0, 1, 1], [], []>} : vector<8x32xbf16>, vector<32x128xbf16>, vector<8x128xf32> -> vector<8x128xf32>
    %344 = arith.addf %341, %343 : vector<8x128xf32>
    %345 = arith.negf %344 : vector<8x128xf32>
    %346 = math.exp %345 : vector<8x128xf32>
    %cst_115 = arith.constant 1.000000e+00 : f32
    %347 = vector.broadcast %cst_115 : f32 to vector<8x128xf32>
    %348 = arith.addf %347, %346 : vector<8x128xf32>
    %349 = arith.divf %347, %348 : vector<8x128xf32>
    %350 = math.tanh %344 : vector<8x128xf32>
    %351 = vector.extract_strided_slice %349 {offsets = [0, 0], sizes = [8, 32], strides = [1, 1]} : vector<8x128xf32> to vector<8x32xf32>
    %352 = vector.extract_strided_slice %349 {offsets = [0, 32], sizes = [8, 32], strides = [1, 1]} : vector<8x128xf32> to vector<8x32xf32>
    %353 = vector.extract_strided_slice %350 {offsets = [0, 64], sizes = [8, 32], strides = [1, 1]} : vector<8x128xf32> to vector<8x32xf32>
    %354 = vector.extract_strided_slice %349 {offsets = [0, 96], sizes = [8, 32], strides = [1, 1]} : vector<8x128xf32> to vector<8x32xf32>
    %355 = arith.mulf %352, %337 : vector<8x32xf32>
    %356 = arith.mulf %351, %353 : vector<8x32xf32>
    %357 = arith.addf %355, %356 : vector<8x32xf32>
    %358 = math.tanh %357 : vector<8x32xf32>
    %359 = arith.mulf %354, %358 : vector<8x32xf32>
    %c56_116 = arith.constant 56 : index
    %c0_117 = arith.constant 0 : index
    %360 = vector.load %arg12[%c56_116, %c0_117] : memref<72x32xf32, #tpu.memory_space<vmem>>, vector<8x32xf32>
    tpu.vector_store %arg12[%c56_116, %c0_117], %359 {strides = array<i32>} : memref<72x32xf32, #tpu.memory_space<vmem>>, vector<8x32xf32>,
    %c64_118 = arith.constant 64 : index
    %c0_119 = arith.constant 0 : index
    %361 = vector.load %arg11[%c64_118, %c0_119] : memref<72x128xf32, #tpu.memory_space<vmem>>, vector<8x128xf32>
    %362 = arith.truncf %359 : vector<8x32xf32> to vector<8x32xbf16>
    %cst_120 = arith.constant dense<0.000000e+00> : vector<8x128xf32>
    %363 = tpu.matmul %362, %198, %cst_120 {dimension_numbers = #tpu.dot_dimension_numbers<[1], [0], [0], [1], [0, 0, 1, 1], [], []>} : vector<8x32xbf16>, vector<32x128xbf16>, vector<8x128xf32> -> vector<8x128xf32>
    %364 = arith.addf %361, %363 : vector<8x128xf32>
    %365 = arith.negf %364 : vector<8x128xf32>
    %366 = math.exp %365 : vector<8x128xf32>
    %cst_121 = arith.constant 1.000000e+00 : f32
    %367 = vector.broadcast %cst_121 : f32 to vector<8x128xf32>
    %368 = arith.addf %367, %366 : vector<8x128xf32>
    %369 = arith.divf %367, %368 : vector<8x128xf32>
    %370 = math.tanh %364 : vector<8x128xf32>
    %371 = vector.extract_strided_slice %369 {offsets = [0, 0], sizes = [8, 32], strides = [1, 1]} : vector<8x128xf32> to vector<8x32xf32>
    %372 = vector.extract_strided_slice %369 {offsets = [0, 32], sizes = [8, 32], strides = [1, 1]} : vector<8x128xf32> to vector<8x32xf32>
    %373 = vector.extract_strided_slice %370 {offsets = [0, 64], sizes = [8, 32], strides = [1, 1]} : vector<8x128xf32> to vector<8x32xf32>
    %374 = vector.extract_strided_slice %369 {offsets = [0, 96], sizes = [8, 32], strides = [1, 1]} : vector<8x128xf32> to vector<8x32xf32>
    %375 = arith.mulf %372, %357 : vector<8x32xf32>
    %376 = arith.mulf %371, %373 : vector<8x32xf32>
    %377 = arith.addf %375, %376 : vector<8x32xf32>
    %378 = math.tanh %377 : vector<8x32xf32>
    %379 = arith.mulf %374, %378 : vector<8x32xf32>
    %c64_122 = arith.constant 64 : index
    %c0_123 = arith.constant 0 : index
    %380 = vector.load %arg12[%c64_122, %c0_123] : memref<72x32xf32, #tpu.memory_space<vmem>>, vector<8x32xf32>
    tpu.vector_store %arg12[%c64_122, %c0_123], %379 {strides = array<i32>} : memref<72x32xf32, #tpu.memory_space<vmem>>, vector<8x32xf32>,
    %c0_124 = arith.constant 0 : index
    %c0_125 = arith.constant 0 : index
    %381 = vector.load %arg12[%c0_124, %c0_125] : memref<72x32xf32, #tpu.memory_space<vmem>>, vector<72x32xf32>
    %382 = arith.truncf %381 : vector<72x32xf32> to vector<72x32xbf16>
    %c0_126 = arith.constant 0 : index
    %c0_127 = arith.constant 0 : index
    %383 = vector.load %arg8[%c0_126, %c0_127] : memref<32x128xbf16, #tpu.memory_space<vmem>>, vector<32x128xbf16>
    %cst_128 = arith.constant dense<0.000000e+00> : vector<72x128xf32>
    %384 = tpu.matmul %382, %383, %cst_128 {dimension_numbers = #tpu.dot_dimension_numbers<[1], [0], [0], [1], [0, 0, 1, 1], [], []>} : vector<72x32xbf16>, vector<32x128xbf16>, vector<72x128xf32> -> vector<72x128xf32>
    %c0_129 = arith.constant 0 : index
    %c0_130 = arith.constant 0 : index
    %385 = vector.load %arg9[%c0_129, %c0_130] : memref<1x128xf32, #tpu.memory_space<vmem>>, vector<1x128xf32>
    %386 = vector.broadcast %385 : vector<1x128xf32> to vector<72x128xf32>
    %387 = arith.addf %384, %386 : vector<72x128xf32>
    %c0_131 = arith.constant 0 : index
    %c0_132 = arith.constant 0 : index
    %388 = vector.load %arg10[%c0_131, %c0_132] : memref<72x128xf32, #tpu.memory_space<vmem>>, vector<72x128xf32>
    tpu.vector_store %arg10[%c0_131, %c0_132], %387 {strides = array<i32>} : memref<72x128xf32, #tpu.memory_space<vmem>>, vector<72x128xf32>,
    return
  }
  func.func @transform_0(%arg0: i32) -> (i32, i32) {
    %c0_i32 = arith.constant 0 : i32
    %c0_i32_0 = arith.constant 0 : i32
    %c0_i32_1 = arith.constant 0 : i32
    return %c0_i32, %c0_i32_0 : i32, i32
  }
  func.func @transform_1(%arg0: i32) -> (i32, i32) {
    %c0_i32 = arith.constant 0 : i32
    %c0_i32_0 = arith.constant 0 : i32
    %c0_i32_1 = arith.constant 0 : i32
    return %c0_i32, %c0_i32_0 : i32, i32
  }
  func.func @transform_2(%arg0: i32) -> (i32, i32) {
    %c0_i32 = arith.constant 0 : i32
    %c0_i32_0 = arith.constant 0 : i32
    %c0_i32_1 = arith.constant 0 : i32
    return %c0_i32, %c0_i32_0 : i32, i32
  }
  func.func @transform_3(%arg0: i32) -> (i32, i32) {
    %c0_i32 = arith.constant 0 : i32
    %c0_i32_0 = arith.constant 0 : i32
    %c0_i32_1 = arith.constant 0 : i32
    return %c0_i32, %c0_i32_0 : i32, i32
  }
  func.func @transform_4(%arg0: i32) -> (i32, i32) {
    %c0_i32 = arith.constant 0 : i32
    %c0_i32_0 = arith.constant 0 : i32
    %c0_i32_1 = arith.constant 0 : i32
    return %c0_i32, %c0_i32_0 : i32, i32
  }
  func.func @transform_5(%arg0: i32) -> (i32, i32) {
    %c0_i32 = arith.constant 0 : i32
    %c0_i32_0 = arith.constant 0 : i32
    %c0_i32_1 = arith.constant 0 : i32
    return %c0_i32, %c0_i32_0 : i32, i32
  }
  func.func @transform_6(%arg0: i32) -> (i32, i32) {
    %c0_i32 = arith.constant 0 : i32
    %c0_i32_0 = arith.constant 0 : i32
    %c0_i32_1 = arith.constant 0 : i32
    return %c0_i32, %c0_i32_0 : i32, i32
  }
  func.func @transform_7(%arg0: i32) -> (i32, i32) {
    %c0_i32 = arith.constant 0 : i32
    %c0_i32_0 = arith.constant 0 : i32
    return %c0_i32, %arg0 : i32, i32
  }
  func.func @transform_8(%arg0: i32) -> (i32, i32) {
    %c0_i32 = arith.constant 0 : i32
    %c0_i32_0 = arith.constant 0 : i32
    return %c0_i32, %arg0 : i32, i32
  }
  func.func @transform_9(%arg0: i32) -> (i32, i32) {
    %c0_i32 = arith.constant 0 : i32
    %c0_i32_0 = arith.constant 0 : i32
    return %c0_i32, %arg0 : i32, i32
  }
}

</mosaic_0001>

<llo_original>
// kernel: tpu_custom_call.1
$region0: #{tpu_custom_call.1}
  #allocation0 [shape = 'u32[]', space=smem, size = 0x4, offset = 0x4, fixed_abs, tag = 'smem constant byte address 0x4 - core index']
  #allocation1 [shape = 'u32[72,128]{1,0:T(1,128)}', space=vmem, size = 0x9000, scoped, tag = 'internal scratch']
  #allocation2 [shape = 'f32[72,128]{1,0:T(8,128)}', space=vmem, size = 0x9000, scoped, tag = 'scratch operand']
  #allocation3 [shape = 'f32[72,32]{1,0:T(8,128)}', space=vmem, size = 0x9000, scoped, tag = 'scratch operand']
  %s0 = inlined_call_operand.vmem [shape: bf16[72,32], index: 0, kind: input, shape index: {}]
  %s1 = inlined_call_operand.vmem [shape: bf16[32,128], index: 1, kind: input, shape index: {}]
  %s2 = inlined_call_operand.vmem [shape: bf16[32,128], index: 2, kind: input, shape index: {}]
  %s3 = inlined_call_operand.vmem [shape: f32[1,128], index: 3, kind: input, shape index: {}]
  %s4 = inlined_call_operand.vmem [shape: bf16[32,128], index: 4, kind: input, shape index: {}]
  %s5 = inlined_call_operand.hbm [shape: bf16[32,128], index: 5, kind: input, shape index: {}]
  %s6 = inlined_call_operand.vmem [shape: f32[1,128], index: 6, kind: input, shape index: {}]
  %s7 = inlined_call_operand.hbm [shape: bf16[32,128], index: 7, kind: input, shape index: {}]
  %s8 = inlined_call_operand.vmem [shape: f32[1,128], index: 8, kind: input, shape index: {}]
  %s9 = inlined_call_operand.hbm [shape: f32[72,128], index: 9, kind: output, shape index: {}]
  %s10 = sld [smem:[#allocation0]]
  $region54: #{tpu_custom_call.1} parent=0
    _
  %s12 = ssub.s32 1, %s10
  %s13 = scalar_select 0, %s12, %s10
  $region1: #{tpu_custom_call.1} parent=0
    #allocation4 [shape = 'u8[8192]{0}', space=vmem, size = 0x2000, scoped, tag = 'input window, operand 5, single buffered']
    #allocation5 [shape = 's32[1]{0}', space=sflag, size = 0x4, scoped, tag = 'scoped memory for tpu_custom_call.1']
    #allocation6 [shape = 's32[1]{0}', space=sflag, size = 0x4, scoped, tag = 'scoped memory for tpu_custom_call.1']
    #allocation7 [shape = 'u8[8192]{0}', space=vmem, size = 0x2000, scoped, tag = 'input window, operand 7, single buffered']
    #allocation8 [shape = 's32[1]{0}', space=sflag, size = 0x4, scoped, tag = 'scoped memory for tpu_custom_call.1']
    #allocation9 [shape = 'u8[36864]{0}', space=vmem, size = 0x9000, scoped, tag = 'output window, operand 0, single buffered']
    %14 = vsyncpa [#allocation5], 0
    %15 = vsyncpa [#allocation8], 0
    %16 = vsyncpa [#allocation6], 0
    // Predicated region
    $region2: #{tpu_custom_call.1} parent=1 // pred_check
      _
    $region3: #{tpu_custom_call.1} parent=1 // pred_check_branch
      %18 = sbr.rel (0) target = $region5
    $region4: #{tpu_custom_call.1} parent=1 // pred_region
      _
    $region5: #{tpu_custom_call.1} parent=1 // pred_fallthru
      _
    // Predicated region
    $region6: #{tpu_custom_call.1} parent=1 // pred_check
      _
    $region7: #{tpu_custom_call.1} parent=1 // pred_check_branch
      %20 = sbr.rel (0) target = $region9
    $region8: #{tpu_custom_call.1} parent=1 // pred_region
      _
    $region9: #{tpu_custom_call.1} parent=1 // pred_fallthru
      _
    // Predicated region
    $region10: #{tpu_custom_call.1} parent=1 // pred_check
      _
    $region11: #{tpu_custom_call.1} parent=1 // pred_check_branch
      %22 = sbr.rel (0) target = $region13
    $region12: #{tpu_custom_call.1} parent=1 // pred_region
      _
    $region13: #{tpu_custom_call.1} parent=1 // pred_fallthru
      _
    // Predicated region
    $region14: #{tpu_custom_call.1} parent=1 // pred_check
      _
    $region15: #{tpu_custom_call.1} parent=1 // pred_check_branch
      %24 = sbr.rel (0) target = $region17
    $region16: #{tpu_custom_call.1} parent=1 // pred_region
      _
    $region17: #{tpu_custom_call.1} parent=1 // pred_fallthru
      _
    // Predicated region
    $region18: #{tpu_custom_call.1} parent=1 // pred_check
      _
    $region19: #{tpu_custom_call.1} parent=1 // pred_check_branch
      %26 = sbr.rel (0) target = $region21
    $region20: #{tpu_custom_call.1} parent=1 // pred_region
      _
    $region21: #{tpu_custom_call.1} parent=1 // pred_fallthru
      _
    // Predicated region
    $region22: #{tpu_custom_call.1} parent=1 // pred_check
      _
    $region23: #{tpu_custom_call.1} parent=1 // pred_check_branch
      %28 = sbr.rel (0) target = $region25
    $region24: #{tpu_custom_call.1} parent=1 // pred_region
      %30 = vsyncadd [#allocation5], 0
      %s31 = sshll.u32 %s5, 4
      %s32 = int_to_ptr.hbm [resolvable:$true] %s31
      %s33 = sshll.u32 [#allocation4], 4
      %s34 = int_to_ptr.vmem [resolvable:$true] %s33
      %39 = dma.hbm_to_vmem [thread:$0]  %s32, 256, %s34, [#allocation5], 64, 64, 4
    $region25: #{tpu_custom_call.1} parent=1 // pred_fallthru
      _
    // Predicated region
    $region26: #{tpu_custom_call.1} parent=1 // pred_check
      _
    $region27: #{tpu_custom_call.1} parent=1 // pred_check_branch
      %41 = sbr.rel (0) target = $region29
    $region28: #{tpu_custom_call.1} parent=1 // pred_region
      _
    $region29: #{tpu_custom_call.1} parent=1 // pred_fallthru
      _
    // Predicated region
    $region30: #{tpu_custom_call.1} parent=1 // pred_check
      _
    $region31: #{tpu_custom_call.1} parent=1 // pred_check_branch
      %43 = sbr.rel (0) target = $region33
    $region32: #{tpu_custom_call.1} parent=1 // pred_region
      %45 = vsyncadd [#allocation8], 0
      %s46 = sshll.u32 %s7, 4
      %s47 = int_to_ptr.hbm [resolvable:$true] %s46
      %s48 = sshll.u32 [#allocation7], 4
      %s49 = int_to_ptr.vmem [resolvable:$true] %s48
      %54 = dma.hbm_to_vmem [thread:$0]  %s47, 256, %s49, [#allocation8], 64, 64, 4
    $region33: #{tpu_custom_call.1} parent=1 // pred_fallthru
      _
    // Predicated region
    $region34: #{tpu_custom_call.1} parent=1 // pred_check
      _
    $region35: #{tpu_custom_call.1} parent=1 // pred_check_branch
      %56 = sbr.rel (0) target = $region37
    $region36: #{tpu_custom_call.1} parent=1 // pred_region
      _
    $region37: #{tpu_custom_call.1} parent=1 // pred_fallthru
      _
    // Predicated region
    $region38: #{tpu_custom_call.1} parent=1 // pred_check
      _
    $region39: #{tpu_custom_call.1} parent=1 // pred_check_branch
      %58 = sbr.rel (0) target = $region41
    $region40: #{tpu_custom_call.1} parent=1 // pred_region
      %60 = dma.done [#allocation5], 256
    $region41: #{tpu_custom_call.1} parent=1 // pred_fallthru
      _
    // Predicated region
    $region42: #{tpu_custom_call.1} parent=1 // pred_check
      _
    $region43: #{tpu_custom_call.1} parent=1 // pred_check_branch
      %62 = sbr.rel (0) target = $region45
    $region44: #{tpu_custom_call.1} parent=1 // pred_region
      %64 = dma.done [#allocation8], 256
    $region45: #{tpu_custom_call.1} parent=1 // pred_fallthru
      _
    %v66 = vld [vmem:[%s0] sm:$0xf]
    %v67 = vld [vmem:[%s0 + $0x4] sm:$0xf]
    %v68 = vld [vmem:[%s0 + $0x8] sm:$0xf]
    %v69 = vld [vmem:[%s0 + $0xc] sm:$0xf]
    %v70 = vld [vmem:[%s0 + $0x10] sm:$0xf]
    %v71 = vld [vmem:[%s0 + $0x14] sm:$0xf]
    %v72 = vld [vmem:[%s0 + $0x18] sm:$0xf]
    %v73 = vld [vmem:[%s0 + $0x1c] sm:$0xf]
    %v74 = vld [vmem:[%s0 + $0x20] sm:$0xf]
    %v75 = vld [vmem:[%s1] sm:$0xf]
    %v76 = vld [vmem:[%s1 + $0x4] sm:$0xf]
    %v77 = vld [vmem:[%s1 + $0x8] sm:$0xf]
    %v78 = vld [vmem:[%s1 + $0xc] sm:$0xf]
    %v79 = vld [vmem:[%s3] sm:$0x1]
    %v81 = vperm.slane %v79, 0
    %v92 = vunpack.c.l.b16 %v66
    %v93 = vunpack.c.l.b16 %v67
    %v94 = vunpack.c.l.b16 %v68
    %v95 = vunpack.c.l.b16 %v69
    %v96 = vunpack.c.l.b16 %v70
    %v97 = vunpack.c.l.b16 %v71
    %v98 = vunpack.c.l.b16 %v72
    %v99 = vunpack.c.l.b16 %v73
    %v100 = vunpack.c.l.b16 %v74
    %v101 = vpack.c.b16 %v93, %v92
    %v102 = vpack.c.b16 %v95, %v94
    %v103 = vpack.c.b16 %v97, %v96
    %v104 = vpack.c.b16 %v99, %v98
    %v105 = vpack.c.b16 %v100, %v100
    %v110 = vunpack.c.l.b16 %v75
    %v111 = vunpack.c.l.b16 %v76
    %v112 = vunpack.c.l.b16 %v77
    %v113 = vunpack.c.l.b16 %v78
    %v114 = vpack.c.b16 %v111, %v110
    %v115 = vpack.c.b16 %v113, %v112
    %vm118 = vcmask 261120
    %v120 = vsel %vm118, %v101, 0
    %v123 = vsel %vm118, %v102, 0
    %v126 = vsel %vm118, %v103, 0
    %v129 = vsel %vm118, %v104, 0
    %v132 = vsel %vm118, %v105, 0
    %134 = vmatpush.bf16.msra.mxu0 0
    %135 = vmatpush.bf16.msra.mxu0 0
    %136 = vmatpush.bf16.msra.mxu0 0
    %137 = vmatpush.bf16.msra.mxu0 0
    %138 = vmatpush.bf16.msra.mxu0 0
    %139 = vmatpush.bf16.msra.mxu0 0
    %140 = vmatpush.bf16.msra.mxu0 %v115
    %141 = vmatpush.bf16.msra.mxu0 %v114
    %142 = vmatmul.bf16.gmra.mxu0 %v120
    %v143 = vpop.f32.mrf.mxu0
    %v144 = vadd.f32 %v81, %v143
    %v145 = vpop.f32.mrf.mxu0
    %v146 = vadd.f32 %v81, %v145
    %147 = vmatmul.bf16.gmra.mxu0 %v123
    %v148 = vpop.f32.mrf.mxu0
    %v149 = vadd.f32 %v81, %v148
    %v150 = vpop.f32.mrf.mxu0
    %v151 = vadd.f32 %v81, %v150
    %152 = vmatmul.bf16.gmra.mxu0 %v126
    %v153 = vpop.f32.mrf.mxu0
    %v154 = vadd.f32 %v81, %v153
    %v155 = vpop.f32.mrf.mxu0
    %v156 = vadd.f32 %v81, %v155
    %157 = vmatmul.bf16.gmra.mxu0 %v129
    %v158 = vpop.f32.mrf.mxu0
    %v159 = vadd.f32 %v81, %v158
    %v160 = vpop.f32.mrf.mxu0
    %v161 = vadd.f32 %v81, %v160
    %162 = vmatmul.bf16.gmra.mxu0 %v132
    %v163 = vpop.f32.mrf.mxu0
    %v164 = vadd.f32 %v81, %v163
    %v165 = vpop.f32.mrf.mxu0
    %166 = vdwg.mxu0
    %167 = vst [vmem:[#allocation2] sm:$0xff] %v144
    %168 = vst [vmem:[#allocation2 + $0x8] sm:$0xff] %v146
    %169 = vst [vmem:[#allocation2 + $0x10] sm:$0xff] %v149
    %170 = vst [vmem:[#allocation2 + $0x18] sm:$0xff] %v151
    %171 = vst [vmem:[#allocation2 + $0x20] sm:$0xff] %v154
    %172 = vst [vmem:[#allocation2 + $0x28] sm:$0xff] %v156
    %173 = vst [vmem:[#allocation2 + $0x30] sm:$0xff] %v159
    %174 = vst [vmem:[#allocation2 + $0x38] sm:$0xff] %v161
    %175 = vst [vmem:[#allocation2 + $0x40] sm:$0xff] %v164
    %v176 = vld [vmem:[%s2] sm:$0xf]
    %v177 = vld [vmem:[%s2 + $0x4] sm:$0xf]
    %v178 = vld [vmem:[%s2 + $0x8] sm:$0xf]
    %v179 = vld [vmem:[%s2 + $0xc] sm:$0xf]
    %v180 = vld [vmem:[#allocation2] sm:$0xff]
    %v185 = vunpack.c.l.b16 %v176
    %v186 = vunpack.c.l.b16 %v177
    %v187 = vunpack.c.l.b16 %v178
    %v188 = vunpack.c.l.b16 %v179
    %v189 = vpack.c.b16 %v186, %v185
    %v190 = vpack.c.b16 %v188, %v187
    %v194 = vsel %vm118, 0, 0
    %196 = vmatpush.bf16.msra.mxu0 0
    %197 = vmatpush.bf16.msra.mxu0 0
    %198 = vmatpush.bf16.msra.mxu0 0
    %199 = vmatpush.bf16.msra.mxu0 0
    %200 = vmatpush.bf16.msra.mxu0 0
    %201 = vmatpush.bf16.msra.mxu0 0
    %202 = vmatpush.bf16.msra.mxu0 %v190
    %203 = vmatpush.bf16.msra.mxu0 %v189
    %204 = vmatmul.bf16.gmra.mxu0 %v194
    %v205 = vpop.f32.mrf.mxu0
    %v206 = vadd.f32 0.0, %v205
    %v207 = vpop.f32.mrf.mxu0
    %208 = vdwg.mxu0
    %v209 = vadd.f32 %v180, %v206
    %v210 = vxor.u32 %v209, 2147483648
    %v211 = vmul.f32 %v210, 1.442695
    %v212 = vpow.pop %v211
    %v213 = vadd.f32 %v212, 1.0
    %v214 = vrcp.pop %v213
    %v215 = vmul.f32 %v213, %v214
    %v216 = vsub.f32 1.0, %v215
    %v217 = vmul.f32 %v214, %v216
    %v218 = vadd.f32 %v214, %v217
    %vm219 = vweird.f32 %v213
    %vm220 = vweird.f32 %v214
    %vm221 = vmor %vm219, %vm220
    %v222 = vsel %vm221, %v214, %v218
    %v223 = vand.u32 2147483647, %v213
    %vm224 = vcmp.eq.f32.partialorder %v223, 8.507059e+37
    %v225 = vand.u32 %v213, 2147483648
    %v226 = vor.u32 1.1754944e-38, %v225
    %v227 = vsel %vm224, %v226, %v222
    %v228 = vmul.f32 1.0, %v227
    %v229 = vtanh.pop %v209
    %v230 = vmul.f32 %v228, 0.0
    %232 = vrot.lane.b32.xlu0 %v229, 64
    %v233 = vpop.permute.xlu0 %232
    %v235 = vmul.f32 %v228, %v233
    %237 = vrot.lane.b32.xlu0 %v235, 32
    %v238 = vpop.permute.xlu0 %237
    %v240 = vadd.f32 %v230, %v238
    %v241 = vtanh.pop %v240
    %243 = vrot.lane.b32.xlu0 %v241, 64
    %v244 = vpop.permute.xlu0 %243
    %v246 = vmul.f32 %v228, %v244
    %248 = vrot.lane.b32.xlu0 %v246, 32
    %v249 = vpop.permute.xlu0 %248
    %251 = vst.msk [vmem:[#allocation3] sm:$0xff] %vm118, %v249
    %v252 = vld [vmem:[#allocation2 + $0x8] sm:$0xff]
    %v253 = vpack.c.bf16 %v246, %v246
    %255 = vrot.lane.b32.xlu0 %v253, 32
    %v256 = vpop.permute.xlu0 %255
    %v258 = vsel %vm118, %v256, 0
    %260 = vmatpush.bf16.msra.mxu0 0
    %261 = vmatpush.bf16.msra.mxu0 0
    %262 = vmatpush.bf16.msra.mxu0 0
    %263 = vmatpush.bf16.msra.mxu0 0
    %264 = vmatpush.bf16.msra.mxu0 0
    %265 = vmatpush.bf16.msra.mxu0 0
    %266 = vmatpush.bf16.msra.mxu0 %v190
    %267 = vmatpush.bf16.msra.mxu0 %v189
    %268 = vmatmul.bf16.gmra.mxu0 %v258
    %v269 = vpop.f32.mrf.mxu0
    %v270 = vadd.f32 0.0, %v269
    %v271 = vpop.f32.mrf.mxu0
    %272 = vdwg.mxu0
    %v273 = vadd.f32 %v252, %v270
    %v274 = vxor.u32 %v273, 2147483648
    %v275 = vmul.f32 %v274, 1.442695
    %v276 = vpow.pop %v275
    %v277 = vadd.f32 %v276, 1.0
    %v278 = vrcp.pop %v277
    %v279 = vmul.f32 %v277, %v278
    %v280 = vsub.f32 1.0, %v279
    %v281 = vmul.f32 %v278, %v280
    %v282 = vadd.f32 %v278, %v281
    %vm283 = vweird.f32 %v277
    %vm284 = vweird.f32 %v278
    %vm285 = vmor %vm283, %vm284
    %v286 = vsel %vm285, %v278, %v282
    %v287 = vand.u32 2147483647, %v277
    %vm288 = vcmp.eq.f32.partialorder %v287, 8.507059e+37
    %v289 = vand.u32 %v277, 2147483648
    %v290 = vor.u32 1.1754944e-38, %v289
    %v291 = vsel %vm288, %v290, %v286
    %v292 = vmul.f32 1.0, %v291
    %v293 = vtanh.pop %v273
    %v294 = vmul.f32 %v292, %v240
    %296 = vrot.lane.b32.xlu0 %v293, 64
    %v297 = vpop.permute.xlu0 %296
    %v299 = vmul.f32 %v292, %v297
    %301 = vrot.lane.b32.xlu0 %v299, 32
    %v302 = vpop.permute.xlu0 %301
    %v304 = vadd.f32 %v294, %v302
    %v305 = vtanh.pop %v304
    %307 = vrot.lane.b32.xlu0 %v305, 64
    %v308 = vpop.permute.xlu0 %307
    %v310 = vmul.f32 %v292, %v308
    %312 = vrot.lane.b32.xlu0 %v310, 32
    %v313 = vpop.permute.xlu0 %312
    %315 = vst.msk [vmem:[#allocation3 + $0x8] sm:$0xff] %vm118, %v313
    %v316 = vld [vmem:[#allocation2 + $0x10] sm:$0xff]
    %v317 = vpack.c.bf16 %v310, %v310
    %319 = vrot.lane.b32.xlu0 %v317, 32
    %v320 = vpop.permute.xlu0 %319
    %v322 = vsel %vm118, %v320, 0
    %324 = vmatpush.bf16.msra.mxu0 0
    %325 = vmatpush.bf16.msra.mxu0 0
    %326 = vmatpush.bf16.msra.mxu0 0
    %327 = vmatpush.bf16.msra.mxu0 0
    %328 = vmatpush.bf16.msra.mxu0 0
    %329 = vmatpush.bf16.msra.mxu0 0
    %330 = vmatpush.bf16.msra.mxu0 %v190
    %331 = vmatpush.bf16.msra.mxu0 %v189
    %332 = vmatmul.bf16.gmra.mxu0 %v322
    %v333 = vpop.f32.mrf.mxu0
    %v334 = vadd.f32 0.0, %v333
    %v335 = vpop.f32.mrf.mxu0
    %336 = vdwg.mxu0
    %v337 = vadd.f32 %v316, %v334
    %v338 = vxor.u32 %v337, 2147483648
    %v339 = vmul.f32 %v338, 1.442695
    %v340 = vpow.pop %v339
    %v341 = vadd.f32 %v340, 1.0
    %v342 = vrcp.pop %v341
    %v343 = vmul.f32 %v341, %v342
    %v344 = vsub.f32 1.0, %v343
    %v345 = vmul.f32 %v342, %v344
    %v346 = vadd.f32 %v342, %v345
    %vm347 = vweird.f32 %v341
    %vm348 = vweird.f32 %v342
    %vm349 = vmor %vm347, %vm348
    %v350 = vsel %vm349, %v342, %v346
    %v351 = vand.u32 2147483647, %v341
    %vm352 = vcmp.eq.f32.partialorder %v351, 8.507059e+37
    %v353 = vand.u32 %v341, 2147483648
    %v354 = vor.u32 1.1754944e-38, %v353
    %v355 = vsel %vm352, %v354, %v350
    %v356 = vmul.f32 1.0, %v355
    %v357 = vtanh.pop %v337
    %v358 = vmul.f32 %v356, %v304
    %360 = vrot.lane.b32.xlu0 %v357, 64
    %v361 = vpop.permute.xlu0 %360
    %v363 = vmul.f32 %v356, %v361
    %365 = vrot.lane.b32.xlu0 %v363, 32
    %v366 = vpop.permute.xlu0 %365
    %v368 = vadd.f32 %v358, %v366
    %v369 = vtanh.pop %v368
    %371 = vrot.lane.b32.xlu0 %v369, 64
    %v372 = vpop.permute.xlu0 %371
    %v374 = vmul.f32 %v356, %v372
    %376 = vrot.lane.b32.xlu0 %v374, 32
    %v377 = vpop.permute.xlu0 %376
    %379 = vst.msk [vmem:[#allocation3 + $0x10] sm:$0xff] %vm118, %v377
    %v380 = vld [vmem:[#allocation2 + $0x18] sm:$0xff]
    %v381 = vpack.c.bf16 %v374, %v374
    %383 = vrot.lane.b32.xlu0 %v381, 32
    %v384 = vpop.permute.xlu0 %383
    %v386 = vsel %vm118, %v384, 0
    %388 = vmatpush.bf16.msra.mxu0 0
    %389 = vmatpush.bf16.msra.mxu0 0
    %390 = vmatpush.bf16.msra.mxu0 0
    %391 = vmatpush.bf16.msra.mxu0 0
    %392 = vmatpush.bf16.msra.mxu0 0
    %393 = vmatpush.bf16.msra.mxu0 0
    %394 = vmatpush.bf16.msra.mxu0 %v190
    %395 = vmatpush.bf16.msra.mxu0 %v189
    %396 = vmatmul.bf16.gmra.mxu0 %v386
    %v397 = vpop.f32.mrf.mxu0
    %v398 = vadd.f32 0.0, %v397
    %v399 = vpop.f32.mrf.mxu0
    %400 = vdwg.mxu0
    %v401 = vadd.f32 %v380, %v398
    %v402 = vxor.u32 %v401, 2147483648
    %v403 = vmul.f32 %v402, 1.442695
    %v404 = vpow.pop %v403
    %v405 = vadd.f32 %v404, 1.0
    %v406 = vrcp.pop %v405
    %v407 = vmul.f32 %v405, %v406
    %v408 = vsub.f32 1.0, %v407
    %v409 = vmul.f32 %v406, %v408
    %v410 = vadd.f32 %v406, %v409
    %vm411 = vweird.f32 %v405
    %vm412 = vweird.f32 %v406
    %vm413 = vmor %vm411, %vm412
    %v414 = vsel %vm413, %v406, %v410
    %v415 = vand.u32 2147483647, %v405
    %vm416 = vcmp.eq.f32.partialorder %v415, 8.507059e+37
    %v417 = vand.u32 %v405, 2147483648
    %v418 = vor.u32 1.1754944e-38, %v417
    %v419 = vsel %vm416, %v418, %v414
    %v420 = vmul.f32 1.0, %v419
    %v421 = vtanh.pop %v401
    %v422 = vmul.f32 %v420, %v368
    %424 = vrot.lane.b32.xlu0 %v421, 64
    %v425 = vpop.permute.xlu0 %424
    %v427 = vmul.f32 %v420, %v425
    %429 = vrot.lane.b32.xlu0 %v427, 32
    %v430 = vpop.permute.xlu0 %429
    %v432 = vadd.f32 %v422, %v430
    %v433 = vtanh.pop %v432
    %435 = vrot.lane.b32.xlu0 %v433, 64
    %v436 = vpop.permute.xlu0 %435
    %v438 = vmul.f32 %v420, %v436
    %440 = vrot.lane.b32.xlu0 %v438, 32
    %v441 = vpop.permute.xlu0 %440
    %443 = vst.msk [vmem:[#allocation3 + $0x18] sm:$0xff] %vm118, %v441
    %v444 = vld [vmem:[#allocation2 + $0x20] sm:$0xff]
    %v445 = vpack.c.bf16 %v438, %v438
    %447 = vrot.lane.b32.xlu0 %v445, 32
    %v448 = vpop.permute.xlu0 %447
    %v450 = vsel %vm118, %v448, 0
    %452 = vmatpush.bf16.msra.mxu0 0
    %453 = vmatpush.bf16.msra.mxu0 0
    %454 = vmatpush.bf16.msra.mxu0 0
    %455 = vmatpush.bf16.msra.mxu0 0
    %456 = vmatpush.bf16.msra.mxu0 0
    %457 = vmatpush.bf16.msra.mxu0 0
    %458 = vmatpush.bf16.msra.mxu0 %v190
    %459 = vmatpush.bf16.msra.mxu0 %v189
    %460 = vmatmul.bf16.gmra.mxu0 %v450
    %v461 = vpop.f32.mrf.mxu0
    %v462 = vadd.f32 0.0, %v461
    %v463 = vpop.f32.mrf.mxu0
    %464 = vdwg.mxu0
    %v465 = vadd.f32 %v444, %v462
    %v466 = vxor.u32 %v465, 2147483648
    %v467 = vmul.f32 %v466, 1.442695
    %v468 = vpow.pop %v467
    %v469 = vadd.f32 %v468, 1.0
    %v470 = vrcp.pop %v469
    %v471 = vmul.f32 %v469, %v470
    %v472 = vsub.f32 1.0, %v471
    %v473 = vmul.f32 %v470, %v472
    %v474 = vadd.f32 %v470, %v473
    %vm475 = vweird.f32 %v469
    %vm476 = vweird.f32 %v470
    %vm477 = vmor %vm475, %vm476
    %v478 = vsel %vm477, %v470, %v474
    %v479 = vand.u32 2147483647, %v469
    %vm480 = vcmp.eq.f32.partialorder %v479, 8.507059e+37
    %v481 = vand.u32 %v469, 2147483648
    %v482 = vor.u32 1.1754944e-38, %v481
    %v483 = vsel %vm480, %v482, %v478
    %v484 = vmul.f32 1.0, %v483
    %v485 = vtanh.pop %v465
    %v486 = vmul.f32 %v484, %v432
    %488 = vrot.lane.b32.xlu0 %v485, 64
    %v489 = vpop.permute.xlu0 %488
    %v491 = vmul.f32 %v484, %v489
    %493 = vrot.lane.b32.xlu0 %v491, 32
    %v494 = vpop.permute.xlu0 %493
    %v496 = vadd.f32 %v486, %v494
    %v497 = vtanh.pop %v496
    %499 = vrot.lane.b32.xlu0 %v497, 64
    %v500 = vpop.permute.xlu0 %499
    %v502 = vmul.f32 %v484, %v500
    %504 = vrot.lane.b32.xlu0 %v502, 32
    %v505 = vpop.permute.xlu0 %504
    %507 = vst.msk [vmem:[#allocation3 + $0x20] sm:$0xff] %vm118, %v505
    %v508 = vld [vmem:[#allocation2 + $0x28] sm:$0xff]
    %v509 = vpack.c.bf16 %v502, %v502
    %511 = vrot.lane.b32.xlu0 %v509, 32
    %v512 = vpop.permute.xlu0 %511
    %v514 = vsel %vm118, %v512, 0
    %516 = vmatpush.bf16.msra.mxu0 0
    %517 = vmatpush.bf16.msra.mxu0 0
    %518 = vmatpush.bf16.msra.mxu0 0
    %519 = vmatpush.bf16.msra.mxu0 0
    %520 = vmatpush.bf16.msra.mxu0 0
    %521 = vmatpush.bf16.msra.mxu0 0
    %522 = vmatpush.bf16.msra.mxu0 %v190
    %523 = vmatpush.bf16.msra.mxu0 %v189
    %524 = vmatmul.bf16.gmra.mxu0 %v514
    %v525 = vpop.f32.mrf.mxu0
    %v526 = vadd.f32 0.0, %v525
    %v527 = vpop.f32.mrf.mxu0
    %528 = vdwg.mxu0
    %v529 = vadd.f32 %v508, %v526
    %v530 = vxor.u32 %v529, 2147483648
    %v531 = vmul.f32 %v530, 1.442695
    %v532 = vpow.pop %v531
    %v533 = vadd.f32 %v532, 1.0
    %v534 = vrcp.pop %v533
    %v535 = vmul.f32 %v533, %v534
    %v536 = vsub.f32 1.0, %v535
    %v537 = vmul.f32 %v534, %v536
    %v538 = vadd.f32 %v534, %v537
    %vm539 = vweird.f32 %v533
    %vm540 = vweird.f32 %v534
    %vm541 = vmor %vm539, %vm540
    %v542 = vsel %vm541, %v534, %v538
    %v543 = vand.u32 2147483647, %v533
    %vm544 = vcmp.eq.f32.partialorder %v543, 8.507059e+37
    %v545 = vand.u32 %v533, 2147483648
    %v546 = vor.u32 1.1754944e-38, %v545
    %v547 = vsel %vm544, %v546, %v542
    %v548 = vmul.f32 1.0, %v547
    %v549 = vtanh.pop %v529
    %v550 = vmul.f32 %v548, %v496
    %552 = vrot.lane.b32.xlu0 %v549, 64
    %v553 = vpop.permute.xlu0 %552
    %v555 = vmul.f32 %v548, %v553
    %557 = vrot.lane.b32.xlu0 %v555, 32
    %v558 = vpop.permute.xlu0 %557
    %v560 = vadd.f32 %v550, %v558
    %v561 = vtanh.pop %v560
    %563 = vrot.lane.b32.xlu0 %v561, 64
    %v564 = vpop.permute.xlu0 %563
    %v566 = vmul.f32 %v548, %v564
    %568 = vrot.lane.b32.xlu0 %v566, 32
    %v569 = vpop.permute.xlu0 %568
    %571 = vst.msk [vmem:[#allocation3 + $0x28] sm:$0xff] %vm118, %v569
    %v572 = vld [vmem:[#allocation2 + $0x30] sm:$0xff]
    %v573 = vpack.c.bf16 %v566, %v566
    %575 = vrot.lane.b32.xlu0 %v573, 32
    %v576 = vpop.permute.xlu0 %575
    %v578 = vsel %vm118, %v576, 0
    %580 = vmatpush.bf16.msra.mxu0 0
    %581 = vmatpush.bf16.msra.mxu0 0
    %582 = vmatpush.bf16.msra.mxu0 0
    %583 = vmatpush.bf16.msra.mxu0 0
    %584 = vmatpush.bf16.msra.mxu0 0
    %585 = vmatpush.bf16.msra.mxu0 0
    %586 = vmatpush.bf16.msra.mxu0 %v190
    %587 = vmatpush.bf16.msra.mxu0 %v189
    %588 = vmatmul.bf16.gmra.mxu0 %v578
    %v589 = vpop.f32.mrf.mxu0
    %v590 = vadd.f32 0.0, %v589
    %v591 = vpop.f32.mrf.mxu0
    %592 = vdwg.mxu0
    %v593 = vadd.f32 %v572, %v590
    %v594 = vxor.u32 %v593, 2147483648
    %v595 = vmul.f32 %v594, 1.442695
    %v596 = vpow.pop %v595
    %v597 = vadd.f32 %v596, 1.0
    %v598 = vrcp.pop %v597
    %v599 = vmul.f32 %v597, %v598
    %v600 = vsub.f32 1.0, %v599
    %v601 = vmul.f32 %v598, %v600
    %v602 = vadd.f32 %v598, %v601
    %vm603 = vweird.f32 %v597
    %vm604 = vweird.f32 %v598
    %vm605 = vmor %vm603, %vm604
    %v606 = vsel %vm605, %v598, %v602
    %v607 = vand.u32 2147483647, %v597
    %vm608 = vcmp.eq.f32.partialorder %v607, 8.507059e+37
    %v609 = vand.u32 %v597, 2147483648
    %v610 = vor.u32 1.1754944e-38, %v609
    %v611 = vsel %vm608, %v610, %v606
    %v612 = vmul.f32 1.0, %v611
    %v613 = vtanh.pop %v593
    %v614 = vmul.f32 %v612, %v560
    %616 = vrot.lane.b32.xlu0 %v613, 64
    %v617 = vpop.permute.xlu0 %616
    %v619 = vmul.f32 %v612, %v617
    %621 = vrot.lane.b32.xlu0 %v619, 32
    %v622 = vpop.permute.xlu0 %621
    %v624 = vadd.f32 %v614, %v622
    %v625 = vtanh.pop %v624
    %627 = vrot.lane.b32.xlu0 %v625, 64
    %v628 = vpop.permute.xlu0 %627
    %v630 = vmul.f32 %v612, %v628
    %632 = vrot.lane.b32.xlu0 %v630, 32
    %v633 = vpop.permute.xlu0 %632
    %635 = vst.msk [vmem:[#allocation3 + $0x30] sm:$0xff] %vm118, %v633
    %v636 = vld [vmem:[#allocation2 + $0x38] sm:$0xff]
    %v637 = vpack.c.bf16 %v630, %v630
    %639 = vrot.lane.b32.xlu0 %v637, 32
    %v640 = vpop.permute.xlu0 %639
    %v642 = vsel %vm118, %v640, 0
    %644 = vmatpush.bf16.msra.mxu0 0
    %645 = vmatpush.bf16.msra.mxu0 0
    %646 = vmatpush.bf16.msra.mxu0 0
    %647 = vmatpush.bf16.msra.mxu0 0
    %648 = vmatpush.bf16.msra.mxu0 0
    %649 = vmatpush.bf16.msra.mxu0 0
    %650 = vmatpush.bf16.msra.mxu0 %v190
    %651 = vmatpush.bf16.msra.mxu0 %v189
    %652 = vmatmul.bf16.gmra.mxu0 %v642
    %v653 = vpop.f32.mrf.mxu0
    %v654 = vadd.f32 0.0, %v653
    %v655 = vpop.f32.mrf.mxu0
    %656 = vdwg.mxu0
    %v657 = vadd.f32 %v636, %v654
    %v658 = vxor.u32 %v657, 2147483648
    %v659 = vmul.f32 %v658, 1.442695
    %v660 = vpow.pop %v659
    %v661 = vadd.f32 %v660, 1.0
    %v662 = vrcp.pop %v661
    %v663 = vmul.f32 %v661, %v662
    %v664 = vsub.f32 1.0, %v663
    %v665 = vmul.f32 %v662, %v664
    %v666 = vadd.f32 %v662, %v665
    %vm667 = vweird.f32 %v661
    %vm668 = vweird.f32 %v662
    %vm669 = vmor %vm667, %vm668
    %v670 = vsel %vm669, %v662, %v666
    %v671 = vand.u32 2147483647, %v661
    %vm672 = vcmp.eq.f32.partialorder %v671, 8.507059e+37
    %v673 = vand.u32 %v661, 2147483648
    %v674 = vor.u32 1.1754944e-38, %v673
    %v675 = vsel %vm672, %v674, %v670
    %v676 = vmul.f32 1.0, %v675
    %v677 = vtanh.pop %v657
    %v678 = vmul.f32 %v676, %v624
    %680 = vrot.lane.b32.xlu0 %v677, 64
    %v681 = vpop.permute.xlu0 %680
    %v683 = vmul.f32 %v676, %v681
    %685 = vrot.lane.b32.xlu0 %v683, 32
    %v686 = vpop.permute.xlu0 %685
    %v688 = vadd.f32 %v678, %v686
    %v689 = vtanh.pop %v688
    %691 = vrot.lane.b32.xlu0 %v689, 64
    %v692 = vpop.permute.xlu0 %691
    %v694 = vmul.f32 %v676, %v692
    %696 = vrot.lane.b32.xlu0 %v694, 32
    %v697 = vpop.permute.xlu0 %696
    %699 = vst.msk [vmem:[#allocation3 + $0x38] sm:$0xff] %vm118, %v697
    %v700 = vld [vmem:[#allocation2 + $0x40] sm:$0xff]
    %v701 = vpack.c.bf16 %v694, %v694
    %703 = vrot.lane.b32.xlu0 %v701, 32
    %v704 = vpop.permute.xlu0 %703
    %v706 = vsel %vm118, %v704, 0
    %708 = vmatpush.bf16.msra.mxu0 0
    %709 = vmatpush.bf16.msra.mxu0 0
    %710 = vmatpush.bf16.msra.mxu0 0
    %711 = vmatpush.bf16.msra.mxu0 0
    %712 = vmatpush.bf16.msra.mxu0 0
    %713 = vmatpush.bf16.msra.mxu0 0
    %714 = vmatpush.bf16.msra.mxu0 %v190
    %715 = vmatpush.bf16.msra.mxu0 %v189
    %716 = vmatmul.bf16.gmra.mxu0 %v706
    %v717 = vpop.f32.mrf.mxu0
    %v718 = vadd.f32 0.0, %v717
    %v719 = vpop.f32.mrf.mxu0
    %720 = vdwg.mxu0
    %v721 = vadd.f32 %v700, %v718
    %v722 = vxor.u32 %v721, 2147483648
    %v723 = vmul.f32 %v722, 1.442695
    %v724 = vpow.pop %v723
    %v725 = vadd.f32 %v724, 1.0
    %v726 = vrcp.pop %v725
    %v727 = vmul.f32 %v725, %v726
    %v728 = vsub.f32 1.0, %v727
    %v729 = vmul.f32 %v726, %v728
    %v730 = vadd.f32 %v726, %v729
    %vm731 = vweird.f32 %v725
    %vm732 = vweird.f32 %v726
    %vm733 = vmor %vm731, %vm732
    %v734 = vsel %vm733, %v726, %v730
    %v735 = vand.u32 2147483647, %v725
    %vm736 = vcmp.eq.f32.partialorder %v735, 8.507059e+37
    %v737 = vand.u32 %v725, 2147483648
    %v738 = vor.u32 1.1754944e-38, %v737
    %v739 = vsel %vm736, %v738, %v734
    %v740 = vmul.f32 1.0, %v739
    %v741 = vtanh.pop %v721
    %v742 = vmul.f32 %v740, %v688
    %744 = vrot.lane.b32.xlu0 %v741, 64
    %v745 = vpop.permute.xlu0 %744
    %v747 = vmul.f32 %v740, %v745
    %749 = vrot.lane.b32.xlu0 %v747, 32
    %v750 = vpop.permute.xlu0 %749
    %v752 = vadd.f32 %v742, %v750
    %v753 = vtanh.pop %v752
    %755 = vrot.lane.b32.xlu0 %v753, 64
    %v756 = vpop.permute.xlu0 %755
    %v758 = vmul.f32 %v740, %v756
    %760 = vrot.lane.b32.xlu0 %v758, 32
    %v761 = vpop.permute.xlu0 %760
    %763 = vst.msk [vmem:[#allocation3 + $0x40] sm:$0xff] %vm118, %v761
    %v764 = vld [vmem:[#allocation3] sm:$0xff]
    %v765 = vld [vmem:[#allocation3 + $0x8] sm:$0xff]
    %v766 = vld [vmem:[#allocation3 + $0x10] sm:$0xff]
    %v767 = vld [vmem:[#allocation3 + $0x18] sm:$0xff]
    %v768 = vld [vmem:[#allocation3 + $0x20] sm:$0xff]
    %v769 = vld [vmem:[#allocation3 + $0x28] sm:$0xff]
    %v770 = vld [vmem:[#allocation3 + $0x30] sm:$0xff]
    %v771 = vld [vmem:[#allocation3 + $0x38] sm:$0xff]
    %v772 = vld [vmem:[#allocation3 + $0x40] sm:$0xff]
    %v773 = vpack.c.bf16 %v765, %v764
    %v774 = vpack.c.bf16 %v767, %v766
    %v775 = vpack.c.bf16 %v769, %v768
    %v776 = vpack.c.bf16 %v771, %v770
    %v777 = vpack.c.bf16 %v772, %v772
    %v778 = vld [vmem:[%s4] sm:$0xf]
    %v779 = vld [vmem:[%s4 + $0x4] sm:$0xf]
    %v780 = vld [vmem:[%s4 + $0x8] sm:$0xf]
    %v781 = vld [vmem:[%s4 + $0xc] sm:$0xf]
    %v782 = vld [vmem:[%s6] sm:$0x1]
    %v784 = vperm.slane %v782, 0
    %v790 = vunpack.c.l.b16 %v778
    %v791 = vunpack.c.l.b16 %v779
    %v792 = vunpack.c.l.b16 %v780
    %v793 = vunpack.c.l.b16 %v781
    %v794 = vpack.c.b16 %v791, %v790
    %v795 = vpack.c.b16 %v793, %v792
    %v799 = vsel %vm118, %v773, 0
    %v802 = vsel %vm118, %v774, 0
    %v805 = vsel %vm118, %v775, 0
    %v808 = vsel %vm118, %v776, 0
    %v811 = vsel %vm118, %v777, 0
    %813 = vmatpush.bf16.msra.mxu0 0
    %814 = vmatpush.bf16.msra.mxu0 0
    %815 = vmatpush.bf16.msra.mxu0 0
    %816 = vmatpush.bf16.msra.mxu0 0
    %817 = vmatpush.bf16.msra.mxu0 0
    %818 = vmatpush.bf16.msra.mxu0 0
    %819 = vmatpush.bf16.msra.mxu0 %v795
    %820 = vmatpush.bf16.msra.mxu0 %v794
    %821 = vmatmul.bf16.gmra.mxu0 %v799
    %v822 = vpop.f32.mrf.mxu0
    %v823 = vadd.f32 %v784, %v822
    %v824 = vpop.f32.mrf.mxu0
    %v825 = vadd.f32 %v784, %v824
    %826 = vmatmul.bf16.gmra.mxu0 %v802
    %v827 = vpop.f32.mrf.mxu0
    %v828 = vadd.f32 %v784, %v827
    %v829 = vpop.f32.mrf.mxu0
    %v830 = vadd.f32 %v784, %v829
    %831 = vmatmul.bf16.gmra.mxu0 %v805
    %v832 = vpop.f32.mrf.mxu0
    %v833 = vadd.f32 %v784, %v832
    %v834 = vpop.f32.mrf.mxu0
    %v835 = vadd.f32 %v784, %v834
    %836 = vmatmul.bf16.gmra.mxu0 %v808
    %v837 = vpop.f32.mrf.mxu0
    %v838 = vadd.f32 %v784, %v837
    %v839 = vpop.f32.mrf.mxu0
    %v840 = vadd.f32 %v784, %v839
    %841 = vmatmul.bf16.gmra.mxu0 %v811
    %v842 = vpop.f32.mrf.mxu0
    %v843 = vadd.f32 %v784, %v842
    %v844 = vpop.f32.mrf.mxu0
    %845 = vdwg.mxu0
    %846 = vst [vmem:[#allocation2] sm:$0xff] %v823
    %847 = vst [vmem:[#allocation2 + $0x8] sm:$0xff] %v825
    %848 = vst [vmem:[#allocation2 + $0x10] sm:$0xff] %v828
    %849 = vst [vmem:[#allocation2 + $0x18] sm:$0xff] %v830
    %850 = vst [vmem:[#allocation2 + $0x20] sm:$0xff] %v833
    %851 = vst [vmem:[#allocation2 + $0x28] sm:$0xff] %v835
    %852 = vst [vmem:[#allocation2 + $0x30] sm:$0xff] %v838
    %853 = vst [vmem:[#allocation2 + $0x38] sm:$0xff] %v840
    %854 = vst [vmem:[#allocation2 + $0x40] sm:$0xff] %v843
    %v855 = vld [vmem:[#allocation4] sm:$0xf]
    %v856 = vld [vmem:[#allocation4 + $0x4] sm:$0xf]
    %v857 = vld [vmem:[#allocation4 + $0x8] sm:$0xf]
    %v858 = vld [vmem:[#allocation4 + $0xc] sm:$0xf]
    %v859 = vld [vmem:[#allocation2] sm:$0xff]
    %v864 = vunpack.c.l.b16 %v855
    %v865 = vunpack.c.l.b16 %v856
    %v866 = vunpack.c.l.b16 %v857
    %v867 = vunpack.c.l.b16 %v858
    %v868 = vpack.c.b16 %v865, %v864
    %v869 = vpack.c.b16 %v867, %v866
    %872 = vmatpush.bf16.msra.mxu0 0
    %873 = vmatpush.bf16.msra.mxu0 0
    %874 = vmatpush.bf16.msra.mxu0 0
    %875 = vmatpush.bf16.msra.mxu0 0
    %876 = vmatpush.bf16.msra.mxu0 0
    %877 = vmatpush.bf16.msra.mxu0 0
    %878 = vmatpush.bf16.msra.mxu0 %v869
    %879 = vmatpush.bf16.msra.mxu0 %v868
    %880 = vmatmul.bf16.gmra.mxu0 %v194
    %v881 = vpop.f32.mrf.mxu0
    %v882 = vadd.f32 0.0, %v881
    %v883 = vpop.f32.mrf.mxu0
    %884 = vdwg.mxu0
    %v885 = vadd.f32 %v859, %v882
    %v886 = vxor.u32 %v885, 2147483648
    %v887 = vmul.f32 %v886, 1.442695
    %v888 = vpow.pop %v887
    %v889 = vadd.f32 %v888, 1.0
    %v890 = vrcp.pop %v889
    %v891 = vmul.f32 %v889, %v890
    %v892 = vsub.f32 1.0, %v891
    %v893 = vmul.f32 %v890, %v892
    %v894 = vadd.f32 %v890, %v893
    %vm895 = vweird.f32 %v889
    %vm896 = vweird.f32 %v890
    %vm897 = vmor %vm895, %vm896
    %v898 = vsel %vm897, %v890, %v894
    %v899 = vand.u32 2147483647, %v889
    %vm900 = vcmp.eq.f32.partialorder %v899, 8.507059e+37
    %v901 = vand.u32 %v889, 2147483648
    %v902 = vor.u32 1.1754944e-38, %v901
    %v903 = vsel %vm900, %v902, %v898
    %v904 = vmul.f32 1.0, %v903
    %v905 = vtanh.pop %v885
    %v906 = vmul.f32 %v904, 0.0
    %908 = vrot.lane.b32.xlu0 %v905, 64
    %v909 = vpop.permute.xlu0 %908
    %v911 = vmul.f32 %v904, %v909
    %913 = vrot.lane.b32.xlu0 %v911, 32
    %v914 = vpop.permute.xlu0 %913
    %v916 = vadd.f32 %v906, %v914
    %v917 = vtanh.pop %v916
    %919 = vrot.lane.b32.xlu0 %v917, 64
    %v920 = vpop.permute.xlu0 %919
    %v922 = vmul.f32 %v904, %v920
    %924 = vrot.lane.b32.xlu0 %v922, 32
    %v925 = vpop.permute.xlu0 %924
    %927 = vst.msk [vmem:[#allocation3] sm:$0xff] %vm118, %v925
    %v928 = vld [vmem:[#allocation2 + $0x8] sm:$0xff]
    %v929 = vpack.c.bf16 %v922, %v922
    %931 = vrot.lane.b32.xlu0 %v929, 32
    %v932 = vpop.permute.xlu0 %931
    %v934 = vsel %vm118, %v932, 0
    %936 = vmatpush.bf16.msra.mxu0 0
    %937 = vmatpush.bf16.msra.mxu0 0
    %938 = vmatpush.bf16.msra.mxu0 0
    %939 = vmatpush.bf16.msra.mxu0 0
    %940 = vmatpush.bf16.msra.mxu0 0
    %941 = vmatpush.bf16.msra.mxu0 0
    %942 = vmatpush.bf16.msra.mxu0 %v869
    %943 = vmatpush.bf16.msra.mxu0 %v868
    %944 = vmatmul.bf16.gmra.mxu0 %v934
    %v945 = vpop.f32.mrf.mxu0
    %v946 = vadd.f32 0.0, %v945
    %v947 = vpop.f32.mrf.mxu0
    %948 = vdwg.mxu0
    %v949 = vadd.f32 %v928, %v946
    %v950 = vxor.u32 %v949, 2147483648
    %v951 = vmul.f32 %v950, 1.442695
    %v952 = vpow.pop %v951
    %v953 = vadd.f32 %v952, 1.0
    %v954 = vrcp.pop %v953
    %v955 = vmul.f32 %v953, %v954
    %v956 = vsub.f32 1.0, %v955
    %v957 = vmul.f32 %v954, %v956
    %v958 = vadd.f32 %v954, %v957
    %vm959 = vweird.f32 %v953
    %vm960 = vweird.f32 %v954
    %vm961 = vmor %vm959, %vm960
    %v962 = vsel %vm961, %v954, %v958
    %v963 = vand.u32 2147483647, %v953
    %vm964 = vcmp.eq.f32.partialorder %v963, 8.507059e+37
    %v965 = vand.u32 %v953, 2147483648
    %v966 = vor.u32 1.1754944e-38, %v965
    %v967 = vsel %vm964, %v966, %v962
    %v968 = vmul.f32 1.0, %v967
    %v969 = vtanh.pop %v949
    %v970 = vmul.f32 %v968, %v916
    %972 = vrot.lane.b32.xlu0 %v969, 64
    %v973 = vpop.permute.xlu0 %972
    %v975 = vmul.f32 %v968, %v973
    %977 = vrot.lane.b32.xlu0 %v975, 32
    %v978 = vpop.permute.xlu0 %977
    %v980 = vadd.f32 %v970, %v978
    %v981 = vtanh.pop %v980
    %983 = vrot.lane.b32.xlu0 %v981, 64
    %v984 = vpop.permute.xlu0 %983
    %v986 = vmul.f32 %v968, %v984
    %988 = vrot.lane.b32.xlu0 %v986, 32
    %v989 = vpop.permute.xlu0 %988
    %991 = vst.msk [vmem:[#allocation3 + $0x8] sm:$0xff] %vm118, %v989
    %v992 = vld [vmem:[#allocation2 + $0x10] sm:$0xff]
    %v993 = vpack.c.bf16 %v986, %v986
    %995 = vrot.lane.b32.xlu0 %v993, 32
    %v996 = vpop.permute.xlu0 %995
    %v998 = vsel %vm118, %v996, 0
    %1000 = vmatpush.bf16.msra.mxu0 0
    %1001 = vmatpush.bf16.msra.mxu0 0
    %1002 = vmatpush.bf16.msra.mxu0 0
    %1003 = vmatpush.bf16.msra.mxu0 0
    %1004 = vmatpush.bf16.msra.mxu0 0
    %1005 = vmatpush.bf16.msra.mxu0 0
    %1006 = vmatpush.bf16.msra.mxu0 %v869
    %1007 = vmatpush.bf16.msra.mxu0 %v868
    %1008 = vmatmul.bf16.gmra.mxu0 %v998
    %v1009 = vpop.f32.mrf.mxu0
    %v1010 = vadd.f32 0.0, %v1009
    %v1011 = vpop.f32.mrf.mxu0
    %1012 = vdwg.mxu0
    %v1013 = vadd.f32 %v992, %v1010
    %v1014 = vxor.u32 %v1013, 2147483648
    %v1015 = vmul.f32 %v1014, 1.442695
    %v1016 = vpow.pop %v1015
    %v1017 = vadd.f32 %v1016, 1.0
    %v1018 = vrcp.pop %v1017
    %v1019 = vmul.f32 %v1017, %v1018
    %v1020 = vsub.f32 1.0, %v1019
    %v1021 = vmul.f32 %v1018, %v1020
    %v1022 = vadd.f32 %v1018, %v1021
    %vm1023 = vweird.f32 %v1017
    %vm1024 = vweird.f32 %v1018
    %vm1025 = vmor %vm1023, %vm1024
    %v1026 = vsel %vm1025, %v1018, %v1022
    %v1027 = vand.u32 2147483647, %v1017
    %vm1028 = vcmp.eq.f32.partialorder %v1027, 8.507059e+37
    %v1029 = vand.u32 %v1017, 2147483648
    %v1030 = vor.u32 1.1754944e-38, %v1029
    %v1031 = vsel %vm1028, %v1030, %v1026
    %v1032 = vmul.f32 1.0, %v1031
    %v1033 = vtanh.pop %v1013
    %v1034 = vmul.f32 %v1032, %v980
    %1036 = vrot.lane.b32.xlu0 %v1033, 64
    %v1037 = vpop.permute.xlu0 %1036
    %v1039 = vmul.f32 %v1032, %v1037
    %1041 = vrot.lane.b32.xlu0 %v1039, 32
    %v1042 = vpop.permute.xlu0 %1041
    %v1044 = vadd.f32 %v1034, %v1042
    %v1045 = vtanh.pop %v1044
    %1047 = vrot.lane.b32.xlu0 %v1045, 64
    %v1048 = vpop.permute.xlu0 %1047
    %v1050 = vmul.f32 %v1032, %v1048
    %1052 = vrot.lane.b32.xlu0 %v1050, 32
    %v1053 = vpop.permute.xlu0 %1052
    %1055 = vst.msk [vmem:[#allocation3 + $0x10] sm:$0xff] %vm118, %v1053
    %v1056 = vld [vmem:[#allocation2 + $0x18] sm:$0xff]
    %v1057 = vpack.c.bf16 %v1050, %v1050
    %1059 = vrot.lane.b32.xlu0 %v1057, 32
    %v1060 = vpop.permute.xlu0 %1059
    %v1062 = vsel %vm118, %v1060, 0
    %1064 = vmatpush.bf16.msra.mxu0 0
    %1065 = vmatpush.bf16.msra.mxu0 0
    %1066 = vmatpush.bf16.msra.mxu0 0
    %1067 = vmatpush.bf16.msra.mxu0 0
    %1068 = vmatpush.bf16.msra.mxu0 0
    %1069 = vmatpush.bf16.msra.mxu0 0
    %1070 = vmatpush.bf16.msra.mxu0 %v869
    %1071 = vmatpush.bf16.msra.mxu0 %v868
    %1072 = vmatmul.bf16.gmra.mxu0 %v1062
    %v1073 = vpop.f32.mrf.mxu0
    %v1074 = vadd.f32 0.0, %v1073
    %v1075 = vpop.f32.mrf.mxu0
    %1076 = vdwg.mxu0
    %v1077 = vadd.f32 %v1056, %v1074
    %v1078 = vxor.u32 %v1077, 2147483648
    %v1079 = vmul.f32 %v1078, 1.442695
    %v1080 = vpow.pop %v1079
    %v1081 = vadd.f32 %v1080, 1.0
    %v1082 = vrcp.pop %v1081
    %v1083 = vmul.f32 %v1081, %v1082
    %v1084 = vsub.f32 1.0, %v1083
    %v1085 = vmul.f32 %v1082, %v1084
    %v1086 = vadd.f32 %v1082, %v1085
    %vm1087 = vweird.f32 %v1081
    %vm1088 = vweird.f32 %v1082
    %vm1089 = vmor %vm1087, %vm1088
    %v1090 = vsel %vm1089, %v1082, %v1086
    %v1091 = vand.u32 2147483647, %v1081
    %vm1092 = vcmp.eq.f32.partialorder %v1091, 8.507059e+37
    %v1093 = vand.u32 %v1081, 2147483648
    %v1094 = vor.u32 1.1754944e-38, %v1093
    %v1095 = vsel %vm1092, %v1094, %v1090
    %v1096 = vmul.f32 1.0, %v1095
    %v1097 = vtanh.pop %v1077
    %v1098 = vmul.f32 %v1096, %v1044
    %1100 = vrot.lane.b32.xlu0 %v1097, 64
    %v1101 = vpop.permute.xlu0 %1100
    %v1103 = vmul.f32 %v1096, %v1101
    %1105 = vrot.lane.b32.xlu0 %v1103, 32
    %v1106 = vpop.permute.xlu0 %1105
    %v1108 = vadd.f32 %v1098, %v1106
    %v1109 = vtanh.pop %v1108
    %1111 = vrot.lane.b32.xlu0 %v1109, 64
    %v1112 = vpop.permute.xlu0 %1111
    %v1114 = vmul.f32 %v1096, %v1112
    %1116 = vrot.lane.b32.xlu0 %v1114, 32
    %v1117 = vpop.permute.xlu0 %1116
    %1119 = vst.msk [vmem:[#allocation3 + $0x18] sm:$0xff] %vm118, %v1117
    %v1120 = vld [vmem:[#allocation2 + $0x20] sm:$0xff]
    %v1121 = vpack.c.bf16 %v1114, %v1114
    %1123 = vrot.lane.b32.xlu0 %v1121, 32
    %v1124 = vpop.permute.xlu0 %1123
    %v1126 = vsel %vm118, %v1124, 0
    %1128 = vmatpush.bf16.msra.mxu0 0
    %1129 = vmatpush.bf16.msra.mxu0 0
    %1130 = vmatpush.bf16.msra.mxu0 0
    %1131 = vmatpush.bf16.msra.mxu0 0
    %1132 = vmatpush.bf16.msra.mxu0 0
    %1133 = vmatpush.bf16.msra.mxu0 0
    %1134 = vmatpush.bf16.msra.mxu0 %v869
    %1135 = vmatpush.bf16.msra.mxu0 %v868
    %1136 = vmatmul.bf16.gmra.mxu0 %v1126
    %v1137 = vpop.f32.mrf.mxu0
    %v1138 = vadd.f32 0.0, %v1137
    %v1139 = vpop.f32.mrf.mxu0
    %1140 = vdwg.mxu0
    %v1141 = vadd.f32 %v1120, %v1138
    %v1142 = vxor.u32 %v1141, 2147483648
    %v1143 = vmul.f32 %v1142, 1.442695
    %v1144 = vpow.pop %v1143
    %v1145 = vadd.f32 %v1144, 1.0
    %v1146 = vrcp.pop %v1145
    %v1147 = vmul.f32 %v1145, %v1146
    %v1148 = vsub.f32 1.0, %v1147
    %v1149 = vmul.f32 %v1146, %v1148
    %v1150 = vadd.f32 %v1146, %v1149
    %vm1151 = vweird.f32 %v1145
    %vm1152 = vweird.f32 %v1146
    %vm1153 = vmor %vm1151, %vm1152
    %v1154 = vsel %vm1153, %v1146, %v1150
    %v1155 = vand.u32 2147483647, %v1145
    %vm1156 = vcmp.eq.f32.partialorder %v1155, 8.507059e+37
    %v1157 = vand.u32 %v1145, 2147483648
    %v1158 = vor.u32 1.1754944e-38, %v1157
    %v1159 = vsel %vm1156, %v1158, %v1154
    %v1160 = vmul.f32 1.0, %v1159
    %v1161 = vtanh.pop %v1141
    %v1162 = vmul.f32 %v1160, %v1108
    %1164 = vrot.lane.b32.xlu0 %v1161, 64
    %v1165 = vpop.permute.xlu0 %1164
    %v1167 = vmul.f32 %v1160, %v1165
    %1169 = vrot.lane.b32.xlu0 %v1167, 32
    %v1170 = vpop.permute.xlu0 %1169
    %v1172 = vadd.f32 %v1162, %v1170
    %v1173 = vtanh.pop %v1172
    %1175 = vrot.lane.b32.xlu0 %v1173, 64
    %v1176 = vpop.permute.xlu0 %1175
    %v1178 = vmul.f32 %v1160, %v1176
    %1180 = vrot.lane.b32.xlu0 %v1178, 32
    %v1181 = vpop.permute.xlu0 %1180
    %1183 = vst.msk [vmem:[#allocation3 + $0x20] sm:$0xff] %vm118, %v1181
    %v1184 = vld [vmem:[#allocation2 + $0x28] sm:$0xff]
    %v1185 = vpack.c.bf16 %v1178, %v1178
    %1187 = vrot.lane.b32.xlu0 %v1185, 32
    %v1188 = vpop.permute.xlu0 %1187
    %v1190 = vsel %vm118, %v1188, 0
    %1192 = vmatpush.bf16.msra.mxu0 0
    %1193 = vmatpush.bf16.msra.mxu0 0
    %1194 = vmatpush.bf16.msra.mxu0 0
    %1195 = vmatpush.bf16.msra.mxu0 0
    %1196 = vmatpush.bf16.msra.mxu0 0
    %1197 = vmatpush.bf16.msra.mxu0 0
    %1198 = vmatpush.bf16.msra.mxu0 %v869
    %1199 = vmatpush.bf16.msra.mxu0 %v868
    %1200 = vmatmul.bf16.gmra.mxu0 %v1190
    %v1201 = vpop.f32.mrf.mxu0
    %v1202 = vadd.f32 0.0, %v1201
    %v1203 = vpop.f32.mrf.mxu0
    %1204 = vdwg.mxu0
    %v1205 = vadd.f32 %v1184, %v1202
    %v1206 = vxor.u32 %v1205, 2147483648
    %v1207 = vmul.f32 %v1206, 1.442695
    %v1208 = vpow.pop %v1207
    %v1209 = vadd.f32 %v1208, 1.0
    %v1210 = vrcp.pop %v1209
    %v1211 = vmul.f32 %v1209, %v1210
    %v1212 = vsub.f32 1.0, %v1211
    %v1213 = vmul.f32 %v1210, %v1212
    %v1214 = vadd.f32 %v1210, %v1213
    %vm1215 = vweird.f32 %v1209
    %vm1216 = vweird.f32 %v1210
    %vm1217 = vmor %vm1215, %vm1216
    %v1218 = vsel %vm1217, %v1210, %v1214
    %v1219 = vand.u32 2147483647, %v1209
    %vm1220 = vcmp.eq.f32.partialorder %v1219, 8.507059e+37
    %v1221 = vand.u32 %v1209, 2147483648
    %v1222 = vor.u32 1.1754944e-38, %v1221
    %v1223 = vsel %vm1220, %v1222, %v1218
    %v1224 = vmul.f32 1.0, %v1223
    %v1225 = vtanh.pop %v1205
    %v1226 = vmul.f32 %v1224, %v1172
    %1228 = vrot.lane.b32.xlu0 %v1225, 64
    %v1229 = vpop.permute.xlu0 %1228
    %v1231 = vmul.f32 %v1224, %v1229
    %1233 = vrot.lane.b32.xlu0 %v1231, 32
    %v1234 = vpop.permute.xlu0 %1233
    %v1236 = vadd.f32 %v1226, %v1234
    %v1237 = vtanh.pop %v1236
    %1239 = vrot.lane.b32.xlu0 %v1237, 64
    %v1240 = vpop.permute.xlu0 %1239
    %v1242 = vmul.f32 %v1224, %v1240
    %1244 = vrot.lane.b32.xlu0 %v1242, 32
    %v1245 = vpop.permute.xlu0 %1244
    %1247 = vst.msk [vmem:[#allocation3 + $0x28] sm:$0xff] %vm118, %v1245
    %v1248 = vld [vmem:[#allocation2 + $0x30] sm:$0xff]
    %v1249 = vpack.c.bf16 %v1242, %v1242
    %1251 = vrot.lane.b32.xlu0 %v1249, 32
    %v1252 = vpop.permute.xlu0 %1251
    %v1254 = vsel %vm118, %v1252, 0
    %1256 = vmatpush.bf16.msra.mxu0 0
    %1257 = vmatpush.bf16.msra.mxu0 0
    %1258 = vmatpush.bf16.msra.mxu0 0
    %1259 = vmatpush.bf16.msra.mxu0 0
    %1260 = vmatpush.bf16.msra.mxu0 0
    %1261 = vmatpush.bf16.msra.mxu0 0
    %1262 = vmatpush.bf16.msra.mxu0 %v869
    %1263 = vmatpush.bf16.msra.mxu0 %v868
    %1264 = vmatmul.bf16.gmra.mxu0 %v1254
    %v1265 = vpop.f32.mrf.mxu0
    %v1266 = vadd.f32 0.0, %v1265
    %v1267 = vpop.f32.mrf.mxu0
    %1268 = vdwg.mxu0
    %v1269 = vadd.f32 %v1248, %v1266
    %v1270 = vxor.u32 %v1269, 2147483648
    %v1271 = vmul.f32 %v1270, 1.442695
    %v1272 = vpow.pop %v1271
    %v1273 = vadd.f32 %v1272, 1.0
    %v1274 = vrcp.pop %v1273
    %v1275 = vmul.f32 %v1273, %v1274
    %v1276 = vsub.f32 1.0, %v1275
    %v1277 = vmul.f32 %v1274, %v1276
    %v1278 = vadd.f32 %v1274, %v1277
    %vm1279 = vweird.f32 %v1273
    %vm1280 = vweird.f32 %v1274
    %vm1281 = vmor %vm1279, %vm1280
    %v1282 = vsel %vm1281, %v1274, %v1278
    %v1283 = vand.u32 2147483647, %v1273
    %vm1284 = vcmp.eq.f32.partialorder %v1283, 8.507059e+37
    %v1285 = vand.u32 %v1273, 2147483648
    %v1286 = vor.u32 1.1754944e-38, %v1285
    %v1287 = vsel %vm1284, %v1286, %v1282
    %v1288 = vmul.f32 1.0, %v1287
    %v1289 = vtanh.pop %v1269
    %v1290 = vmul.f32 %v1288, %v1236
    %1292 = vrot.lane.b32.xlu0 %v1289, 64
    %v1293 = vpop.permute.xlu0 %1292
    %v1295 = vmul.f32 %v1288, %v1293
    %1297 = vrot.lane.b32.xlu0 %v1295, 32
    %v1298 = vpop.permute.xlu0 %1297
    %v1300 = vadd.f32 %v1290, %v1298
    %v1301 = vtanh.pop %v1300
    %1303 = vrot.lane.b32.xlu0 %v1301, 64
    %v1304 = vpop.permute.xlu0 %1303
    %v1306 = vmul.f32 %v1288, %v1304
    %1308 = vrot.lane.b32.xlu0 %v1306, 32
    %v1309 = vpop.permute.xlu0 %1308
    %1311 = vst.msk [vmem:[#allocation3 + $0x30] sm:$0xff] %vm118, %v1309
    %v1312 = vld [vmem:[#allocation2 + $0x38] sm:$0xff]
    %v1313 = vpack.c.bf16 %v1306, %v1306
    %1315 = vrot.lane.b32.xlu0 %v1313, 32
    %v1316 = vpop.permute.xlu0 %1315
    %v1318 = vsel %vm118, %v1316, 0
    %1320 = vmatpush.bf16.msra.mxu0 0
    %1321 = vmatpush.bf16.msra.mxu0 0
    %1322 = vmatpush.bf16.msra.mxu0 0
    %1323 = vmatpush.bf16.msra.mxu0 0
    %1324 = vmatpush.bf16.msra.mxu0 0
    %1325 = vmatpush.bf16.msra.mxu0 0
    %1326 = vmatpush.bf16.msra.mxu0 %v869
    %1327 = vmatpush.bf16.msra.mxu0 %v868
    %1328 = vmatmul.bf16.gmra.mxu0 %v1318
    %v1329 = vpop.f32.mrf.mxu0
    %v1330 = vadd.f32 0.0, %v1329
    %v1331 = vpop.f32.mrf.mxu0
    %1332 = vdwg.mxu0
    %v1333 = vadd.f32 %v1312, %v1330
    %v1334 = vxor.u32 %v1333, 2147483648
    %v1335 = vmul.f32 %v1334, 1.442695
    %v1336 = vpow.pop %v1335
    %v1337 = vadd.f32 %v1336, 1.0
    %v1338 = vrcp.pop %v1337
    %v1339 = vmul.f32 %v1337, %v1338
    %v1340 = vsub.f32 1.0, %v1339
    %v1341 = vmul.f32 %v1338, %v1340
    %v1342 = vadd.f32 %v1338, %v1341
    %vm1343 = vweird.f32 %v1337
    %vm1344 = vweird.f32 %v1338
    %vm1345 = vmor %vm1343, %vm1344
    %v1346 = vsel %vm1345, %v1338, %v1342
    %v1347 = vand.u32 2147483647, %v1337
    %vm1348 = vcmp.eq.f32.partialorder %v1347, 8.507059e+37
    %v1349 = vand.u32 %v1337, 2147483648
    %v1350 = vor.u32 1.1754944e-38, %v1349
    %v1351 = vsel %vm1348, %v1350, %v1346
    %v1352 = vmul.f32 1.0, %v1351
    %v1353 = vtanh.pop %v1333
    %v1354 = vmul.f32 %v1352, %v1300
    %1356 = vrot.lane.b32.xlu0 %v1353, 64
    %v1357 = vpop.permute.xlu0 %1356
    %v1359 = vmul.f32 %v1352, %v1357
    %1361 = vrot.lane.b32.xlu0 %v1359, 32
    %v1362 = vpop.permute.xlu0 %1361
    %v1364 = vadd.f32 %v1354, %v1362
    %v1365 = vtanh.pop %v1364
    %1367 = vrot.lane.b32.xlu0 %v1365, 64
    %v1368 = vpop.permute.xlu0 %1367
    %v1370 = vmul.f32 %v1352, %v1368
    %1372 = vrot.lane.b32.xlu0 %v1370, 32
    %v1373 = vpop.permute.xlu0 %1372
    %1375 = vst.msk [vmem:[#allocation3 + $0x38] sm:$0xff] %vm118, %v1373
    %v1376 = vld [vmem:[#allocation2 + $0x40] sm:$0xff]
    %v1377 = vpack.c.bf16 %v1370, %v1370
    %1379 = vrot.lane.b32.xlu0 %v1377, 32
    %v1380 = vpop.permute.xlu0 %1379
    %v1382 = vsel %vm118, %v1380, 0
    %1384 = vmatpush.bf16.msra.mxu0 0
    %1385 = vmatpush.bf16.msra.mxu0 0
    %1386 = vmatpush.bf16.msra.mxu0 0
    %1387 = vmatpush.bf16.msra.mxu0 0
    %1388 = vmatpush.bf16.msra.mxu0 0
    %1389 = vmatpush.bf16.msra.mxu0 0
    %1390 = vmatpush.bf16.msra.mxu0 %v869
    %1391 = vmatpush.bf16.msra.mxu0 %v868
    %1392 = vmatmul.bf16.gmra.mxu0 %v1382
    %v1393 = vpop.f32.mrf.mxu0
    %v1394 = vadd.f32 0.0, %v1393
    %v1395 = vpop.f32.mrf.mxu0
    %1396 = vdwg.mxu0
    %v1397 = vadd.f32 %v1376, %v1394
    %v1398 = vxor.u32 %v1397, 2147483648
    %v1399 = vmul.f32 %v1398, 1.442695
    %v1400 = vpow.pop %v1399
    %v1401 = vadd.f32 %v1400, 1.0
    %v1402 = vrcp.pop %v1401
    %v1403 = vmul.f32 %v1401, %v1402
    %v1404 = vsub.f32 1.0, %v1403
    %v1405 = vmul.f32 %v1402, %v1404
    %v1406 = vadd.f32 %v1402, %v1405
    %vm1407 = vweird.f32 %v1401
    %vm1408 = vweird.f32 %v1402
    %vm1409 = vmor %vm1407, %vm1408
    %v1410 = vsel %vm1409, %v1402, %v1406
    %v1411 = vand.u32 2147483647, %v1401
    %vm1412 = vcmp.eq.f32.partialorder %v1411, 8.507059e+37
    %v1413 = vand.u32 %v1401, 2147483648
    %v1414 = vor.u32 1.1754944e-38, %v1413
    %v1415 = vsel %vm1412, %v1414, %v1410
    %v1416 = vmul.f32 1.0, %v1415
    %v1417 = vtanh.pop %v1397
    %v1418 = vmul.f32 %v1416, %v1364
    %1420 = vrot.lane.b32.xlu0 %v1417, 64
    %v1421 = vpop.permute.xlu0 %1420
    %v1423 = vmul.f32 %v1416, %v1421
    %1425 = vrot.lane.b32.xlu0 %v1423, 32
    %v1426 = vpop.permute.xlu0 %1425
    %v1428 = vadd.f32 %v1418, %v1426
    %v1429 = vtanh.pop %v1428
    %1431 = vrot.lane.b32.xlu0 %v1429, 64
    %v1432 = vpop.permute.xlu0 %1431
    %v1434 = vmul.f32 %v1416, %v1432
    %1436 = vrot.lane.b32.xlu0 %v1434, 32
    %v1437 = vpop.permute.xlu0 %1436
    %1439 = vst.msk [vmem:[#allocation3 + $0x40] sm:$0xff] %vm118, %v1437
    %v1440 = vld [vmem:[#allocation3] sm:$0xff]
    %v1441 = vld [vmem:[#allocation3 + $0x8] sm:$0xff]
    %v1442 = vld [vmem:[#allocation3 + $0x10] sm:$0xff]
    %v1443 = vld [vmem:[#allocation3 + $0x18] sm:$0xff]
    %v1444 = vld [vmem:[#allocation3 + $0x20] sm:$0xff]
    %v1445 = vld [vmem:[#allocation3 + $0x28] sm:$0xff]
    %v1446 = vld [vmem:[#allocation3 + $0x30] sm:$0xff]
    %v1447 = vld [vmem:[#allocation3 + $0x38] sm:$0xff]
    %v1448 = vld [vmem:[#allocation3 + $0x40] sm:$0xff]
    %v1449 = vpack.c.bf16 %v1441, %v1440
    %v1450 = vpack.c.bf16 %v1443, %v1442
    %v1451 = vpack.c.bf16 %v1445, %v1444
    %v1452 = vpack.c.bf16 %v1447, %v1446
    %v1453 = vpack.c.bf16 %v1448, %v1448
    %v1454 = vld [vmem:[#allocation7] sm:$0xf]
    %v1455 = vld [vmem:[#allocation7 + $0x4] sm:$0xf]
    %v1456 = vld [vmem:[#allocation7 + $0x8] sm:$0xf]
    %v1457 = vld [vmem:[#allocation7 + $0xc] sm:$0xf]
    %v1458 = vld [vmem:[%s8] sm:$0x1]
    %v1460 = vperm.slane %v1458, 0
    %v1466 = vunpack.c.l.b16 %v1454
    %v1467 = vunpack.c.l.b16 %v1455
    %v1468 = vunpack.c.l.b16 %v1456
    %v1469 = vunpack.c.l.b16 %v1457
    %v1470 = vpack.c.b16 %v1467, %v1466
    %v1471 = vpack.c.b16 %v1469, %v1468
    %v1475 = vsel %vm118, %v1449, 0
    %v1478 = vsel %vm118, %v1450, 0
    %v1481 = vsel %vm118, %v1451, 0
    %v1484 = vsel %vm118, %v1452, 0
    %v1487 = vsel %vm118, %v1453, 0
    %1489 = vmatpush.bf16.msra.mxu0 0
    %1490 = vmatpush.bf16.msra.mxu0 0
    %1491 = vmatpush.bf16.msra.mxu0 0
    %1492 = vmatpush.bf16.msra.mxu0 0
    %1493 = vmatpush.bf16.msra.mxu0 0
    %1494 = vmatpush.bf16.msra.mxu0 0
    %1495 = vmatpush.bf16.msra.mxu0 %v1471
    %1496 = vmatpush.bf16.msra.mxu0 %v1470
    %1497 = vmatmul.bf16.gmra.mxu0 %v1475
    %v1498 = vpop.f32.mrf.mxu0
    %v1499 = vadd.f32 %v1460, %v1498
    %v1500 = vpop.f32.mrf.mxu0
    %v1501 = vadd.f32 %v1460, %v1500
    %1502 = vmatmul.bf16.gmra.mxu0 %v1478
    %v1503 = vpop.f32.mrf.mxu0
    %v1504 = vadd.f32 %v1460, %v1503
    %v1505 = vpop.f32.mrf.mxu0
    %v1506 = vadd.f32 %v1460, %v1505
    %1507 = vmatmul.bf16.gmra.mxu0 %v1481
    %v1508 = vpop.f32.mrf.mxu0
    %v1509 = vadd.f32 %v1460, %v1508
    %v1510 = vpop.f32.mrf.mxu0
    %v1511 = vadd.f32 %v1460, %v1510
    %1512 = vmatmul.bf16.gmra.mxu0 %v1484
    %v1513 = vpop.f32.mrf.mxu0
    %v1514 = vadd.f32 %v1460, %v1513
    %v1515 = vpop.f32.mrf.mxu0
    %v1516 = vadd.f32 %v1460, %v1515
    %1517 = vmatmul.bf16.gmra.mxu0 %v1487
    %v1518 = vpop.f32.mrf.mxu0
    %v1519 = vadd.f32 %v1460, %v1518
    %v1520 = vpop.f32.mrf.mxu0
    %1521 = vdwg.mxu0
    %1522 = vst [vmem:[#allocation9] sm:$0xff] %v1499
    %1523 = vst [vmem:[#allocation9 + $0x8] sm:$0xff] %v1501
    %1524 = vst [vmem:[#allocation9 + $0x10] sm:$0xff] %v1504
    %1525 = vst [vmem:[#allocation9 + $0x18] sm:$0xff] %v1506
    %1526 = vst [vmem:[#allocation9 + $0x20] sm:$0xff] %v1509
    %1527 = vst [vmem:[#allocation9 + $0x28] sm:$0xff] %v1511
    %1528 = vst [vmem:[#allocation9 + $0x30] sm:$0xff] %v1514
    %1529 = vst [vmem:[#allocation9 + $0x38] sm:$0xff] %v1516
    %1530 = vst [vmem:[#allocation9 + $0x40] sm:$0xff] %v1519
    // Predicated region
    $region46: #{tpu_custom_call.1} parent=1 // pred_check
      _
    $region47: #{tpu_custom_call.1} parent=1 // pred_check_branch
      %1532 = sbr.rel (0) target = $region49
    $region48: #{tpu_custom_call.1} parent=1 // pred_region
      %1534 = vsyncadd [#allocation6], 0
      %s1535 = sshll.u32 [#allocation9], 4
      %s1536 = int_to_ptr.vmem [resolvable:$true] %s1535
      %s1537 = sshll.u32 %s9, 4
      %s1538 = int_to_ptr.hbm [resolvable:$true] %s1537
      %1543 = dma.vmem_to_hbm [thread:$0]  %s1536, 1152, %s1538, [#allocation6], 128, 128, 8
    $region49: #{tpu_custom_call.1} parent=1 // pred_fallthru
      _
    // Predicated region
    $region50: #{tpu_custom_call.1} parent=1 // pred_check
      _
    $region51: #{tpu_custom_call.1} parent=1 // pred_check_branch
      %1545 = sbr.rel (0) target = $region53
    $region52: #{tpu_custom_call.1} parent=1 // pred_region
      %1547 = dma.done [#allocation6], 1152
    $region53: #{tpu_custom_call.1} parent=1 // pred_fallthru
      _
    %1548 = vsyncpa [#allocation5], 1
    %1549 = vsyncpa [#allocation8], 1
    %1550 = vsyncpa [#allocation6], 1

</llo_original>
